<compile_context>
chip_gen: v6e
topology: v6e:2x2x1
jax: 0.10.0
libtpu: 0.0.40
codegen_flags: <defaults>
</compile_context>

<pallas_src>
import functools

import jax
import jax.numpy as jnp
from jax import lax
from jax.experimental import pallas as pl
from jax.experimental.pallas import tpu as pltpu


def lstm_net_kernel(x_ref, w_ih_ref, w_hh_ref, b_ref, w_lin_ref, b_lin_ref,
                    y_ref, gx_ref, hs_ref, *, unroll):
    # x_ref:     (Tp, I)
    # w_ih_ref:  (I, 4*Hp)   gate-padded, transposed weight_ih_l0
    # w_hh_ref:  (Hp, 4*Hp)  gate-padded, transposed weight_hh_l0
    # b_ref:     (1, 4*Hp)   gate-padded (bias_ih + bias_hh)
    # w_lin_ref: (Hp, 1)     row-padded, transposed linear weight
    # b_lin_ref: (1, 1)
    # y_ref:     (Tp, 1)
    # gx_ref:    (Tp, 4*Hp)  VMEM scratch (hoisted x-path gates)
    # hs_ref:    (Tp, Hp)    VMEM scratch (all hidden states, lane-dense)
    Tp = x_ref.shape[0]
    Hp = w_hh_ref.shape[0]
    U = unroll

    # Hoisted x-path: one (Tp, I) @ (I, 4Hp) matmul + bias, off the recurrence.
    gx_ref[...] = (jnp.dot(x_ref[...], w_ih_ref[...],
                           preferred_element_type=jnp.float32)
                   + b_ref[...])

    # Hoist the recurrent weight load out of the time loop (~3 vregs, stays live).
    w_hh = w_hh_ref[...]

    def outer(i, carry):
        h, c = carry                                   # (1, Hp) each, in vregs
        t0 = pl.multiple_of(i * U, U)
        gx_blk = gx_ref[pl.ds(t0, U), :]               # (U, 4Hp) aligned load
        rows = []
        for u in range(U):                             # unrolled at trace time
            gates = (jnp.dot(h, w_hh, preferred_element_type=jnp.float32)
                     + gx_blk[u:u + 1, :])             # (1, 4Hp)
            # PyTorch gate order: i, f, g, o -- one sigmoid for the whole vector,
            # one tanh for the g tile (2 EUP pushes per step).
            s = jax.nn.sigmoid(gates)
            i_g = s[:, 0 * Hp:1 * Hp]
            f_g = s[:, 1 * Hp:2 * Hp]
            o_g = s[:, 3 * Hp:4 * Hp]
            g_g = jnp.tanh(gates[:, 2 * Hp:3 * Hp])
            c = f_g * c + i_g * g_g
            h = o_g * jnp.tanh(c)
            rows.append(h)
        # One aligned (U, Hp) lane-dense store for U steps of hidden state.
        hs_ref[pl.ds(t0, U), :] = jnp.concatenate(rows, axis=0)
        return (h, c)

    h0 = jnp.zeros((1, Hp), jnp.float32)
    c0 = jnp.zeros((1, Hp), jnp.float32)
    lax.fori_loop(0, Tp // U, outer, (h0, c0))

    # Final Linear: (Tp, Hp) @ (Hp, 1) + b  (padded rows of w_lin are zero).
    y_ref[...] = (jnp.dot(hs_ref[...], w_lin_ref[...],
                          preferred_element_type=jnp.float32)
                  + b_lin_ref[...]).astype(y_ref.dtype)


def lstm_net_pallas(x, w_ih, w_hh, b_ih, b_hh, w_lin, b_lin, *, unroll=8):
    """x: (T, 1) float32. Weights in PyTorch layout:
       w_ih (4H, I), w_hh (4H, H), b_ih (4H,), b_hh (4H,), w_lin (1, H), b_lin (1,)."""
    T, I = x.shape
    H = w_hh.shape[1]
    Hp = 128                                   # lane-align each gate to its own tile
    Tp = ((T + unroll - 1) // unroll) * unroll  # pad time so stores are U-aligned

    w_ih_f = w_ih.astype(jnp.float32)
    w_hh_f = w_hh.astype(jnp.float32)
    b_sum = (b_ih + b_hh).astype(jnp.float32)

    # Gate-padded, transposed weights: gate g occupies lanes [g*Hp, g*Hp+H).
    w_ih_t = jnp.zeros((I, 4 * Hp), jnp.float32)
    w_hh_t = jnp.zeros((Hp, 4 * Hp), jnp.float32)
    b = jnp.zeros((1, 4 * Hp), jnp.float32)
    for g in range(4):
        w_ih_t = w_ih_t.at[:, g * Hp:g * Hp + H].set(w_ih_f[g * H:(g + 1) * H, :].T)
        w_hh_t = w_hh_t.at[:H, g * Hp:g * Hp + H].set(w_hh_f[g * H:(g + 1) * H, :].T)
        b = b.at[:, g * Hp:g * Hp + H].set(b_sum[g * H:(g + 1) * H])

    w_lin_t = jnp.zeros((Hp, 1), jnp.float32).at[:H, :].set(
        w_lin.astype(jnp.float32).T)                              # (Hp, 1)
    b_lin2 = b_lin.reshape(1, 1).astype(jnp.float32)              # (1, 1)

    x_p = jnp.zeros((Tp, I), jnp.float32).at[:T, :].set(x.astype(jnp.float32))

    vmem_spec = pl.BlockSpec(memory_space=pltpu.MemorySpace.VMEM)
    y = pl.pallas_call(
        functools.partial(lstm_net_kernel, unroll=unroll),
        out_shape=jax.ShapeDtypeStruct((Tp, 1), jnp.float32),
        in_specs=[vmem_spec] * 6,
        out_specs=vmem_spec,
        scratch_shapes=[
            pltpu.VMEM((Tp, 4 * Hp), jnp.float32),   # hoisted x-path gates
            pltpu.VMEM((Tp, Hp), jnp.float32),       # all hidden states (lane-dense)
        ],
    )(x_p, w_ih_t, w_hh_t, b, w_lin_t, b_lin2)
    return y[:T]


def lstm_net_ref(x, w_ih, w_hh, b_ih, b_hh, w_lin, b_lin):
    """Pure-JAX reference mirroring PyTorch nn.LSTM + nn.Linear forward."""
    H = w_hh.shape[1]
    b = b_ih + b_hh

    def step(carry, x_t):
        h, c = carry
        gates = x_t @ w_ih.T + h @ w_hh.T + b
        i_g = jax.nn.sigmoid(gates[0 * H:1 * H])
        f_g = jax.nn.sigmoid(gates[1 * H:2 * H])
        g_g = jnp.tanh(gates[2 * H:3 * H])
        o_g = jax.nn.sigmoid(gates[3 * H:4 * H])
        c_new = f_g * c + i_g * g_g
        h_new = o_g * jnp.tanh(c_new)
        return (h_new, c_new), h_new

    h0 = jnp.zeros((H,), jnp.float32)
    c0 = jnp.zeros((H,), jnp.float32)
    _, hs = lax.scan(step, (h0, c0), x)
    return hs @ w_lin.T + b_lin


if __name__ == "__main__":
    hidden_size = 25
    input_size = 1
    seq_len = 16   # small seq length (module uses 500; semantics identical)

    key = jax.random.PRNGKey(0)
    k_x, k1, k2, k3, k4, k5, k6 = jax.random.split(key, 7)
    bound = 1.0 / jnp.sqrt(hidden_size)

    # Deterministic synthetic parameters (PyTorch-style uniform init shapes).
    x = jax.random.uniform(k_x, (seq_len, input_size), jnp.float32)
    w_ih = jax.random.uniform(k1, (4 * hidden_size, input_size), jnp.float32,
                              -bound, bound)
    w_hh = jax.random.uniform(k2, (4 * hidden_size, hidden_size), jnp.float32,
                              -bound, bound)
    b_ih = jax.random.uniform(k3, (4 * hidden_size,), jnp.float32, -bound, bound)
    b_hh = jax.random.uniform(k4, (4 * hidden_size,), jnp.float32, -bound, bound)
    w_lin = jax.random.uniform(k5, (1, hidden_size), jnp.float32, -bound, bound)
    b_lin = jax.random.uniform(k6, (1,), jnp.float32, -bound, bound)

    y = lstm_net_pallas(x, w_ih, w_hh, b_ih, b_hh, w_lin, b_lin)
    y = jax.block_until_ready(y)

    y_ref = lstm_net_ref(x, w_ih, w_hh, b_ih, b_hh, w_lin, b_lin)
    assert y.shape == (seq_len, 1)
    assert jnp.allclose(y, y_ref, atol=1e-5, rtol=1e-5), (
        f"max abs err {jnp.max(jnp.abs(y - y_ref))}")
    print("KERNEL_OK")
</pallas_src>

<mosaic_0001>
module attributes {stable_mosaic.version = 11 : i64} {
  func.func @lstm_net_kernel(%arg0: memref<16x1xf32, #tpu.memory_space<vmem>>, %arg1: memref<1x512xf32, #tpu.memory_space<vmem>>, %arg2: memref<128x512xf32, #tpu.memory_space<vmem>>, %arg3: memref<1x512xf32, #tpu.memory_space<vmem>>, %arg4: memref<128x1xf32, #tpu.memory_space<vmem>>, %arg5: memref<1x1xf32, #tpu.memory_space<vmem>>, %arg6: memref<16x1xf32, #tpu.memory_space<vmem>>, %arg7: memref<16x512xf32, #tpu.memory_space<vmem>>, %arg8: memref<16x128xf32, #tpu.memory_space<vmem>>) attributes {dimension_semantics = [], scalar_prefetch = 0 : i64, scratch_operands = 2 : i64, tpu.core_type = #tpu.core_type<tc>} {
    %c0 = arith.constant 0 : index
    %c0_0 = arith.constant 0 : index
    %0 = vector.load %arg0[%c0, %c0_0] : memref<16x1xf32, #tpu.memory_space<vmem>>, vector<16x1xf32>
    %c0_1 = arith.constant 0 : index
    %c0_2 = arith.constant 0 : index
    %1 = vector.load %arg1[%c0_1, %c0_2] : memref<1x512xf32, #tpu.memory_space<vmem>>, vector<1x512xf32>
    %cst = arith.constant dense<0.000000e+00> : vector<16x512xf32>
    %2 = tpu.matmul %0, %1, %cst {dimension_numbers = #tpu.dot_dimension_numbers<[1], [0], [0], [1], [0, 0, 1, 1], [], []>} : vector<16x1xf32>, vector<1x512xf32>, vector<16x512xf32> -> vector<16x512xf32>
    %c0_3 = arith.constant 0 : index
    %c0_4 = arith.constant 0 : index
    %3 = vector.load %arg3[%c0_3, %c0_4] : memref<1x512xf32, #tpu.memory_space<vmem>>, vector<1x512xf32>
    %4 = vector.broadcast %3 : vector<1x512xf32> to vector<16x512xf32>
    %5 = arith.addf %2, %4 : vector<16x512xf32>
    %c0_5 = arith.constant 0 : index
    %c0_6 = arith.constant 0 : index
    %6 = vector.load %arg7[%c0_5, %c0_6] : memref<16x512xf32, #tpu.memory_space<vmem>>, vector<16x512xf32>
    tpu.vector_store %arg7[%c0_5, %c0_6], %5 {strides = array<i32>} : memref<16x512xf32, #tpu.memory_space<vmem>>, vector<16x512xf32>,
    %c0_7 = arith.constant 0 : index
    %c0_8 = arith.constant 0 : index
    %7 = vector.load %arg2[%c0_7, %c0_8] : memref<128x512xf32, #tpu.memory_space<vmem>>, vector<128x512xf32>
    %cst_9 = arith.constant 0.000000e+00 : f32
    %8 = vector.broadcast %cst_9 : f32 to vector<1x128xf32>
    %cst_10 = arith.constant 0.000000e+00 : f32
    %9 = vector.broadcast %cst_10 : f32 to vector<1x128xf32>
    %c0_i32 = arith.constant 0 : i32
    %c2_i32 = arith.constant 2 : i32
    %10 = arith.addi %c0_i32, %c2_i32 : i32
    %c1_i32 = arith.constant 1 : i32
    %11:2 = scf.for %arg9 = %c0_i32 to %10 step %c1_i32 iter_args(%arg10 = %8, %arg11 = %9) -> (vector<1x128xf32>, vector<1x128xf32>)  : i32 {
      %c8_i32 = arith.constant 8 : i32
      %19 = arith.muli %arg9, %c8_i32 : i32
      %20 = tpu.assume_multiple %19, 8 : i32
      %21 = arith.index_cast %20 : i32 to index
      %c0_21 = arith.constant 0 : index
      %22 = vector.load %arg7[%21, %c0_21] : memref<16x512xf32, #tpu.memory_space<vmem>>, vector<8x512xf32>
      %cst_22 = arith.constant dense<0.000000e+00> : vector<1x512xf32>
      %23 = tpu.matmul %arg10, %7, %cst_22 {dimension_numbers = #tpu.dot_dimension_numbers<[1], [0], [0], [1], [0, 0, 1, 1], [], []>} : vector<1x128xf32>, vector<128x512xf32>, vector<1x512xf32> -> vector<1x512xf32>
      %24 = vector.extract_strided_slice %22 {offsets = [0, 0], sizes = [1, 512], strides = [1, 1]} : vector<8x512xf32> to vector<1x512xf32>
      %25 = arith.addf %23, %24 : vector<1x512xf32>
      %26 = arith.negf %25 : vector<1x512xf32>
      %27 = math.exp %26 : vector<1x512xf32>
      %cst_23 = arith.constant 1.000000e+00 : f32
      %28 = vector.broadcast %cst_23 : f32 to vector<1x512xf32>
      %29 = arith.addf %28, %27 : vector<1x512xf32>
      %30 = arith.divf %28, %29 : vector<1x512xf32>
      %31 = vector.extract_strided_slice %30 {offsets = [0, 0], sizes = [1, 128], strides = [1, 1]} : vector<1x512xf32> to vector<1x128xf32>
      %32 = vector.extract_strided_slice %30 {offsets = [0, 128], sizes = [1, 128], strides = [1, 1]} : vector<1x512xf32> to vector<1x128xf32>
      %33 = vector.extract_strided_slice %30 {offsets = [0, 384], sizes = [1, 128], strides = [1, 1]} : vector<1x512xf32> to vector<1x128xf32>
      %34 = vector.extract_strided_slice %25 {offsets = [0, 256], sizes = [1, 128], strides = [1, 1]} : vector<1x512xf32> to vector<1x128xf32>
      %35 = math.tanh %34 : vector<1x128xf32>
      %36 = arith.mulf %32, %arg11 : vector<1x128xf32>
      %37 = arith.mulf %31, %35 : vector<1x128xf32>
      %38 = arith.addf %36, %37 : vector<1x128xf32>
      %39 = math.tanh %38 : vector<1x128xf32>
      %40 = arith.mulf %33, %39 : vector<1x128xf32>
      %cst_24 = arith.constant dense<0.000000e+00> : vector<1x512xf32>
      %41 = tpu.matmul %40, %7, %cst_24 {dimension_numbers = #tpu.dot_dimension_numbers<[1], [0], [0], [1], [0, 0, 1, 1], [], []>} : vector<1x128xf32>, vector<128x512xf32>, vector<1x512xf32> -> vector<1x512xf32>
      %42 = vector.extract_strided_slice %22 {offsets = [1, 0], sizes = [1, 512], strides = [1, 1]} : vector<8x512xf32> to vector<1x512xf32>
      %43 = arith.addf %41, %42 : vector<1x512xf32>
      %44 = arith.negf %43 : vector<1x512xf32>
      %45 = math.exp %44 : vector<1x512xf32>
      %cst_25 = arith.constant 1.000000e+00 : f32
      %46 = vector.broadcast %cst_25 : f32 to vector<1x512xf32>
      %47 = arith.addf %46, %45 : vector<1x512xf32>
      %48 = arith.divf %46, %47 : vector<1x512xf32>
      %49 = vector.extract_strided_slice %48 {offsets = [0, 0], sizes = [1, 128], strides = [1, 1]} : vector<1x512xf32> to vector<1x128xf32>
      %50 = vector.extract_strided_slice %48 {offsets = [0, 128], sizes = [1, 128], strides = [1, 1]} : vector<1x512xf32> to vector<1x128xf32>
      %51 = vector.extract_strided_slice %48 {offsets = [0, 384], sizes = [1, 128], strides = [1, 1]} : vector<1x512xf32> to vector<1x128xf32>
      %52 = vector.extract_strided_slice %43 {offsets = [0, 256], sizes = [1, 128], strides = [1, 1]} : vector<1x512xf32> to vector<1x128xf32>
      %53 = math.tanh %52 : vector<1x128xf32>
      %54 = arith.mulf %50, %38 : vector<1x128xf32>
      %55 = arith.mulf %49, %53 : vector<1x128xf32>
      %56 = arith.addf %54, %55 : vector<1x128xf32>
      %57 = math.tanh %56 : vector<1x128xf32>
      %58 = arith.mulf %51, %57 : vector<1x128xf32>
      %cst_26 = arith.constant dense<0.000000e+00> : vector<1x512xf32>
      %59 = tpu.matmul %58, %7, %cst_26 {dimension_numbers = #tpu.dot_dimension_numbers<[1], [0], [0], [1], [0, 0, 1, 1], [], []>} : vector<1x128xf32>, vector<128x512xf32>, vector<1x512xf32> -> vector<1x512xf32>
      %60 = vector.extract_strided_slice %22 {offsets = [2, 0], sizes = [1, 512], strides = [1, 1]} : vector<8x512xf32> to vector<1x512xf32>
      %61 = arith.addf %59, %60 : vector<1x512xf32>
      %62 = arith.negf %61 : vector<1x512xf32>
      %63 = math.exp %62 : vector<1x512xf32>
      %cst_27 = arith.constant 1.000000e+00 : f32
      %64 = vector.broadcast %cst_27 : f32 to vector<1x512xf32>
      %65 = arith.addf %64, %63 : vector<1x512xf32>
      %66 = arith.divf %64, %65 : vector<1x512xf32>
      %67 = vector.extract_strided_slice %66 {offsets = [0, 0], sizes = [1, 128], strides = [1, 1]} : vector<1x512xf32> to vector<1x128xf32>
      %68 = vector.extract_strided_slice %66 {offsets = [0, 128], sizes = [1, 128], strides = [1, 1]} : vector<1x512xf32> to vector<1x128xf32>
      %69 = vector.extract_strided_slice %66 {offsets = [0, 384], sizes = [1, 128], strides = [1, 1]} : vector<1x512xf32> to vector<1x128xf32>
      %70 = vector.extract_strided_slice %61 {offsets = [0, 256], sizes = [1, 128], strides = [1, 1]} : vector<1x512xf32> to vector<1x128xf32>
      %71 = math.tanh %70 : vector<1x128xf32>
      %72 = arith.mulf %68, %56 : vector<1x128xf32>
      %73 = arith.mulf %67, %71 : vector<1x128xf32>
      %74 = arith.addf %72, %73 : vector<1x128xf32>
      %75 = math.tanh %74 : vector<1x128xf32>
      %76 = arith.mulf %69, %75 : vector<1x128xf32>
      %cst_28 = arith.constant dense<0.000000e+00> : vector<1x512xf32>
      %77 = tpu.matmul %76, %7, %cst_28 {dimension_numbers = #tpu.dot_dimension_numbers<[1], [0], [0], [1], [0, 0, 1, 1], [], []>} : vector<1x128xf32>, vector<128x512xf32>, vector<1x512xf32> -> vector<1x512xf32>
      %78 = vector.extract_strided_slice %22 {offsets = [3, 0], sizes = [1, 512], strides = [1, 1]} : vector<8x512xf32> to vector<1x512xf32>
      %79 = arith.addf %77, %78 : vector<1x512xf32>
      %80 = arith.negf %79 : vector<1x512xf32>
      %81 = math.exp %80 : vector<1x512xf32>
      %cst_29 = arith.constant 1.000000e+00 : f32
      %82 = vector.broadcast %cst_29 : f32 to vector<1x512xf32>
      %83 = arith.addf %82, %81 : vector<1x512xf32>
      %84 = arith.divf %82, %83 : vector<1x512xf32>
      %85 = vector.extract_strided_slice %84 {offsets = [0, 0], sizes = [1, 128], strides = [1, 1]} : vector<1x512xf32> to vector<1x128xf32>
      %86 = vector.extract_strided_slice %84 {offsets = [0, 128], sizes = [1, 128], strides = [1, 1]} : vector<1x512xf32> to vector<1x128xf32>
      %87 = vector.extract_strided_slice %84 {offsets = [0, 384], sizes = [1, 128], strides = [1, 1]} : vector<1x512xf32> to vector<1x128xf32>
      %88 = vector.extract_strided_slice %79 {offsets = [0, 256], sizes = [1, 128], strides = [1, 1]} : vector<1x512xf32> to vector<1x128xf32>
      %89 = math.tanh %88 : vector<1x128xf32>
      %90 = arith.mulf %86, %74 : vector<1x128xf32>
      %91 = arith.mulf %85, %89 : vector<1x128xf32>
      %92 = arith.addf %90, %91 : vector<1x128xf32>
      %93 = math.tanh %92 : vector<1x128xf32>
      %94 = arith.mulf %87, %93 : vector<1x128xf32>
      %cst_30 = arith.constant dense<0.000000e+00> : vector<1x512xf32>
      %95 = tpu.matmul %94, %7, %cst_30 {dimension_numbers = #tpu.dot_dimension_numbers<[1], [0], [0], [1], [0, 0, 1, 1], [], []>} : vector<1x128xf32>, vector<128x512xf32>, vector<1x512xf32> -> vector<1x512xf32>
      %96 = vector.extract_strided_slice %22 {offsets = [4, 0], sizes = [1, 512], strides = [1, 1]} : vector<8x512xf32> to vector<1x512xf32>
      %97 = arith.addf %95, %96 : vector<1x512xf32>
      %98 = arith.negf %97 : vector<1x512xf32>
      %99 = math.exp %98 : vector<1x512xf32>
      %cst_31 = arith.constant 1.000000e+00 : f32
      %100 = vector.broadcast %cst_31 : f32 to vector<1x512xf32>
      %101 = arith.addf %100, %99 : vector<1x512xf32>
      %102 = arith.divf %100, %101 : vector<1x512xf32>
      %103 = vector.extract_strided_slice %102 {offsets = [0, 0], sizes = [1, 128], strides = [1, 1]} : vector<1x512xf32> to vector<1x128xf32>
      %104 = vector.extract_strided_slice %102 {offsets = [0, 128], sizes = [1, 128], strides = [1, 1]} : vector<1x512xf32> to vector<1x128xf32>
      %105 = vector.extract_strided_slice %102 {offsets = [0, 384], sizes = [1, 128], strides = [1, 1]} : vector<1x512xf32> to vector<1x128xf32>
      %106 = vector.extract_strided_slice %97 {offsets = [0, 256], sizes = [1, 128], strides = [1, 1]} : vector<1x512xf32> to vector<1x128xf32>
      %107 = math.tanh %106 : vector<1x128xf32>
      %108 = arith.mulf %104, %92 : vector<1x128xf32>
      %109 = arith.mulf %103, %107 : vector<1x128xf32>
      %110 = arith.addf %108, %109 : vector<1x128xf32>
      %111 = math.tanh %110 : vector<1x128xf32>
      %112 = arith.mulf %105, %111 : vector<1x128xf32>
      %cst_32 = arith.constant dense<0.000000e+00> : vector<1x512xf32>
      %113 = tpu.matmul %112, %7, %cst_32 {dimension_numbers = #tpu.dot_dimension_numbers<[1], [0], [0], [1], [0, 0, 1, 1], [], []>} : vector<1x128xf32>, vector<128x512xf32>, vector<1x512xf32> -> vector<1x512xf32>
      %114 = vector.extract_strided_slice %22 {offsets = [5, 0], sizes = [1, 512], strides = [1, 1]} : vector<8x512xf32> to vector<1x512xf32>
      %115 = arith.addf %113, %114 : vector<1x512xf32>
      %116 = arith.negf %115 : vector<1x512xf32>
      %117 = math.exp %116 : vector<1x512xf32>
      %cst_33 = arith.constant 1.000000e+00 : f32
      %118 = vector.broadcast %cst_33 : f32 to vector<1x512xf32>
      %119 = arith.addf %118, %117 : vector<1x512xf32>
      %120 = arith.divf %118, %119 : vector<1x512xf32>
      %121 = vector.extract_strided_slice %120 {offsets = [0, 0], sizes = [1, 128], strides = [1, 1]} : vector<1x512xf32> to vector<1x128xf32>
      %122 = vector.extract_strided_slice %120 {offsets = [0, 128], sizes = [1, 128], strides = [1, 1]} : vector<1x512xf32> to vector<1x128xf32>
      %123 = vector.extract_strided_slice %120 {offsets = [0, 384], sizes = [1, 128], strides = [1, 1]} : vector<1x512xf32> to vector<1x128xf32>
      %124 = vector.extract_strided_slice %115 {offsets = [0, 256], sizes = [1, 128], strides = [1, 1]} : vector<1x512xf32> to vector<1x128xf32>
      %125 = math.tanh %124 : vector<1x128xf32>
      %126 = arith.mulf %122, %110 : vector<1x128xf32>
      %127 = arith.mulf %121, %125 : vector<1x128xf32>
      %128 = arith.addf %126, %127 : vector<1x128xf32>
      %129 = math.tanh %128 : vector<1x128xf32>
      %130 = arith.mulf %123, %129 : vector<1x128xf32>
      %cst_34 = arith.constant dense<0.000000e+00> : vector<1x512xf32>
      %131 = tpu.matmul %130, %7, %cst_34 {dimension_numbers = #tpu.dot_dimension_numbers<[1], [0], [0], [1], [0, 0, 1, 1], [], []>} : vector<1x128xf32>, vector<128x512xf32>, vector<1x512xf32> -> vector<1x512xf32>
      %132 = vector.extract_strided_slice %22 {offsets = [6, 0], sizes = [1, 512], strides = [1, 1]} : vector<8x512xf32> to vector<1x512xf32>
      %133 = arith.addf %131, %132 : vector<1x512xf32>
      %134 = arith.negf %133 : vector<1x512xf32>
      %135 = math.exp %134 : vector<1x512xf32>
      %cst_35 = arith.constant 1.000000e+00 : f32
      %136 = vector.broadcast %cst_35 : f32 to vector<1x512xf32>
      %137 = arith.addf %136, %135 : vector<1x512xf32>
      %138 = arith.divf %136, %137 : vector<1x512xf32>
      %139 = vector.extract_strided_slice %138 {offsets = [0, 0], sizes = [1, 128], strides = [1, 1]} : vector<1x512xf32> to vector<1x128xf32>
      %140 = vector.extract_strided_slice %138 {offsets = [0, 128], sizes = [1, 128], strides = [1, 1]} : vector<1x512xf32> to vector<1x128xf32>
      %141 = vector.extract_strided_slice %138 {offsets = [0, 384], sizes = [1, 128], strides = [1, 1]} : vector<1x512xf32> to vector<1x128xf32>
      %142 = vector.extract_strided_slice %133 {offsets = [0, 256], sizes = [1, 128], strides = [1, 1]} : vector<1x512xf32> to vector<1x128xf32>
      %143 = math.tanh %142 : vector<1x128xf32>
      %144 = arith.mulf %140, %128 : vector<1x128xf32>
      %145 = arith.mulf %139, %143 : vector<1x128xf32>
      %146 = arith.addf %144, %145 : vector<1x128xf32>
      %147 = math.tanh %146 : vector<1x128xf32>
      %148 = arith.mulf %141, %147 : vector<1x128xf32>
      %cst_36 = arith.constant dense<0.000000e+00> : vector<1x512xf32>
      %149 = tpu.matmul %148, %7, %cst_36 {dimension_numbers = #tpu.dot_dimension_numbers<[1], [0], [0], [1], [0, 0, 1, 1], [], []>} : vector<1x128xf32>, vector<128x512xf32>, vector<1x512xf32> -> vector<1x512xf32>
      %150 = vector.extract_strided_slice %22 {offsets = [7, 0], sizes = [1, 512], strides = [1, 1]} : vector<8x512xf32> to vector<1x512xf32>
      %151 = arith.addf %149, %150 : vector<1x512xf32>
      %152 = arith.negf %151 : vector<1x512xf32>
      %153 = math.exp %152 : vector<1x512xf32>
      %cst_37 = arith.constant 1.000000e+00 : f32
      %154 = vector.broadcast %cst_37 : f32 to vector<1x512xf32>
      %155 = arith.addf %154, %153 : vector<1x512xf32>
      %156 = arith.divf %154, %155 : vector<1x512xf32>
      %157 = vector.extract_strided_slice %156 {offsets = [0, 0], sizes = [1, 128], strides = [1, 1]} : vector<1x512xf32> to vector<1x128xf32>
      %158 = vector.extract_strided_slice %156 {offsets = [0, 128], sizes = [1, 128], strides = [1, 1]} : vector<1x512xf32> to vector<1x128xf32>
      %159 = vector.extract_strided_slice %156 {offsets = [0, 384], sizes = [1, 128], strides = [1, 1]} : vector<1x512xf32> to vector<1x128xf32>
      %160 = vector.extract_strided_slice %151 {offsets = [0, 256], sizes = [1, 128], strides = [1, 1]} : vector<1x512xf32> to vector<1x128xf32>
      %161 = math.tanh %160 : vector<1x128xf32>
      %162 = arith.mulf %158, %146 : vector<1x128xf32>
      %163 = arith.mulf %157, %161 : vector<1x128xf32>
      %164 = arith.addf %162, %163 : vector<1x128xf32>
      %165 = math.tanh %164 : vector<1x128xf32>
      %166 = arith.mulf %159, %165 : vector<1x128xf32>
      %167 = tpu.concatenate %40, %58, %76, %94, %112, %130, %148, %166 in 0 : vector<1x128xf32>, vector<1x128xf32>, vector<1x128xf32>, vector<1x128xf32>, vector<1x128xf32>, vector<1x128xf32>, vector<1x128xf32>, vector<1x128xf32> -> vector<8x128xf32>
      %168 = arith.index_cast %20 : i32 to index
      %c0_38 = arith.constant 0 : index
      %169 = vector.load %arg8[%168, %c0_38] : memref<16x128xf32, #tpu.memory_space<vmem>>, vector<8x128xf32>
      tpu.vector_store %arg8[%168, %c0_38], %167 {strides = array<i32>} : memref<16x128xf32, #tpu.memory_space<vmem>>, vector<8x128xf32>,
      scf.yield %166, %164 : vector<1x128xf32>, vector<1x128xf32>
    }
    %c2_i32_11 = arith.constant 2 : i32
    %c0_12 = arith.constant 0 : index
    %c0_13 = arith.constant 0 : index
    %12 = vector.load %arg8[%c0_12, %c0_13] : memref<16x128xf32, #tpu.memory_space<vmem>>, vector<16x128xf32>
    %c0_14 = arith.constant 0 : index
    %c0_15 = arith.constant 0 : index
    %13 = vector.load %arg4[%c0_14, %c0_15] : memref<128x1xf32, #tpu.memory_space<vmem>>, vector<128x1xf32>
    %cst_16 = arith.constant dense<0.000000e+00> : vector<16x1xf32>
    %14 = tpu.matmul %12, %13, %cst_16 {dimension_numbers = #tpu.dot_dimension_numbers<[1], [0], [0], [1], [0, 0, 1, 1], [], []>} : vector<16x128xf32>, vector<128x1xf32>, vector<16x1xf32> -> vector<16x1xf32>
    %c0_17 = arith.constant 0 : index
    %c0_18 = arith.constant 0 : index
    %15 = vector.load %arg5[%c0_17, %c0_18] : memref<1x1xf32, #tpu.memory_space<vmem>>, vector<1x1xf32>
    %16 = vector.broadcast %15 : vector<1x1xf32> to vector<16x1xf32>
    %17 = arith.addf %14, %16 : vector<16x1xf32>
    %c0_19 = arith.constant 0 : index
    %c0_20 = arith.constant 0 : index
    %18 = vector.load %arg6[%c0_19, %c0_20] : memref<16x1xf32, #tpu.memory_space<vmem>>, vector<16x1xf32>
    tpu.vector_store %arg6[%c0_19, %c0_20], %17 {strides = array<i32>} : memref<16x1xf32, #tpu.memory_space<vmem>>, vector<16x1xf32>,
    return
  }
}

</mosaic_0001>

<llo_original>
// kernel: tpu_custom_call.1
$region0: #{tpu_custom_call.1}
  #allocation0 [shape = 'u32[]', space=smem, size = 0x4, offset = 0x4, fixed_abs, tag = 'smem constant byte address 0x4 - core index']
  #allocation1 [shape = 'u32[144,128]{1,0:T(1,128)}', space=vmem, size = 0x12000, scoped, tag = 'internal scratch']
  #allocation2 [shape = 'f32[16,512]{1,0:T(8,128)}', space=vmem, size = 0x8000, scoped, tag = 'scratch operand']
  #allocation3 [shape = 'f32[16,128]{1,0:T(8,128)}', space=vmem, size = 0x2000, scoped, tag = 'scratch operand']
  #allocation4 [shape = 'f32[1,1]{1,0:T(1,128)S(1)}', space=vmem, size = 0x200, scoped, tag = 'scoped memory for tpu_custom_call.1']
  %s0 = inlined_call_operand.vmem [shape: f32[16,1], index: 0, kind: input, shape index: {}]
  %s1 = inlined_call_operand.vmem [shape: f32[1,512], index: 1, kind: input, shape index: {}]
  %s2 = inlined_call_operand.hbm [shape: f32[128,512], index: 2, kind: input, shape index: {}]
  %s3 = inlined_call_operand.vmem [shape: f32[1,512], index: 3, kind: input, shape index: {}]
  %s4 = inlined_call_operand.vmem [shape: f32[128,1], index: 4, kind: input, shape index: {}]
  %s5 = inlined_call_operand.<no memory space> [shape: f32[1,1], index: 5, kind: input, shape index: {}]
  %s6 = inlined_call_operand.vmem [shape: f32[16,1], index: 6, kind: output, shape index: {}]
  %s7 = sld [smem:[#allocation0]]
  $region45: #{tpu_custom_call.1} parent=0
    _
  %s9 = ssub.s32 1, %s7
  %s10 = scalar_select 0, %s9, %s7
  %v11 = vstv %s5
  %12 = vst [vmem:[#allocation4] sm:$0x1] %v11
  $region1: #{tpu_custom_call.1} parent=0
    #allocation5 [shape = 'u8[262144]{0}', space=vmem, size = 0x40000, scoped, tag = 'input window, operand 2, single buffered']
    #allocation6 [shape = 's32[1]{0}', space=sflag, size = 0x4, scoped, tag = 'scoped memory for tpu_custom_call.1']
    %13 = vsyncpa [#allocation6], 0
    // Predicated region
    $region2: #{tpu_custom_call.1} parent=1 // pred_check
      _
    $region3: #{tpu_custom_call.1} parent=1 // pred_check_branch
      %15 = sbr.rel (0) target = $region5
    $region4: #{tpu_custom_call.1} parent=1 // pred_region
      _
    $region5: #{tpu_custom_call.1} parent=1 // pred_fallthru
      _
    // Predicated region
    $region6: #{tpu_custom_call.1} parent=1 // pred_check
      _
    $region7: #{tpu_custom_call.1} parent=1 // pred_check_branch
      %17 = sbr.rel (0) target = $region9
    $region8: #{tpu_custom_call.1} parent=1 // pred_region
      _
    $region9: #{tpu_custom_call.1} parent=1 // pred_fallthru
      _
    // Predicated region
    $region10: #{tpu_custom_call.1} parent=1 // pred_check
      _
    $region11: #{tpu_custom_call.1} parent=1 // pred_check_branch
      %19 = sbr.rel (0) target = $region13
    $region12: #{tpu_custom_call.1} parent=1 // pred_region
      %s21 = ssub.s32 8192, 8192
      %22 = vsyncadd [#allocation6], %s21
      %s23 = sshll.u32 [#allocation5], 4
      %s24 = int_to_ptr.vmem [resolvable:$true] %s23
      %29 = dma.hbm_to_vmem [thread:$0]  %s2, 8192, %s24, [#allocation6], 512, 512, 32
    $region13: #{tpu_custom_call.1} parent=1 // pred_fallthru
      _
    // Predicated region
    $region14: #{tpu_custom_call.1} parent=1 // pred_check
      _
    $region15: #{tpu_custom_call.1} parent=1 // pred_check_branch
      %31 = sbr.rel (0) target = $region17
    $region16: #{tpu_custom_call.1} parent=1 // pred_region
      _
    $region17: #{tpu_custom_call.1} parent=1 // pred_fallthru
      _
    // Predicated region
    $region18: #{tpu_custom_call.1} parent=1 // pred_check
      _
    $region19: #{tpu_custom_call.1} parent=1 // pred_check_branch
      %33 = sbr.rel (0) target = $region21
    $region20: #{tpu_custom_call.1} parent=1 // pred_region
      _
    $region21: #{tpu_custom_call.1} parent=1 // pred_fallthru
      _
    // Predicated region
    $region22: #{tpu_custom_call.1} parent=1 // pred_check
      _
    $region23: #{tpu_custom_call.1} parent=1 // pred_check_branch
      %35 = sbr.rel (0) target = $region25
    $region24: #{tpu_custom_call.1} parent=1 // pred_region
      _
    $region25: #{tpu_custom_call.1} parent=1 // pred_fallthru
      _
    // Predicated region
    $region26: #{tpu_custom_call.1} parent=1 // pred_check
      _
    $region27: #{tpu_custom_call.1} parent=1 // pred_check_branch
      %37 = sbr.rel (0) target = $region29
    $region28: #{tpu_custom_call.1} parent=1 // pred_region
      %38 = dma.done [#allocation6], 8192
    $region29: #{tpu_custom_call.1} parent=1 // pred_fallthru
      _
    %v39 = vld [vmem:[%s0] sm:$0xff]
    %v40 = vld [vmem:[%s0 + $0x8] sm:$0xff]
    %v41 = vld [vmem:[%s1] sm:$0xf]
    %v42 = vld [vmem:[%s3] sm:$0xf]
    %v44 = vlaneseq
    %v45 = vshrl.u32 %v44, 7
    %v46 = vsub.s32 0, %v45
    %v47 = vrot.slane %v42, %v46
    %v48 = vlaneseq
    %v49 = vshrl.u32 %v48, 7
    %v50 = vsub.s32 1, %v49
    %v51 = vrot.slane %v42, %v50
    %v52 = vlaneseq
    %v53 = vshrl.u32 %v52, 7
    %v54 = vsub.s32 2, %v53
    %v55 = vrot.slane %v42, %v54
    %v56 = vlaneseq
    %v57 = vshrl.u32 %v56, 7
    %v58 = vsub.s32 3, %v57
    %v59 = vrot.slane %v42, %v58
    %v65 = vlaneseq
    %v66 = vshrl.u32 %v65, 7
    %v67 = vsub.s32 0, %v66
    %v68 = vrot.slane %v41, %v67
    %v69 = vlaneseq
    %v70 = vshrl.u32 %v69, 7
    %v71 = vsub.s32 1, %v70
    %v72 = vrot.slane %v41, %v71
    %v73 = vlaneseq
    %v74 = vshrl.u32 %v73, 7
    %v75 = vsub.s32 2, %v74
    %v76 = vrot.slane %v41, %v75
    %v77 = vlaneseq
    %v78 = vshrl.u32 %v77, 7
    %v79 = vsub.s32 3, %v78
    %v80 = vrot.slane %v41, %v79
    %vm81 = vcmask 7168
    %v83 = vsel %vm81, %v39, 0
    %v86 = vsel %vm81, %v40, 0
    %vm88 = vcmask 1040384
    %v89 = vsel %vm88, %v68, 0
    %v91 = vsel %vm88, %v72, 0
    %v93 = vsel %vm88, %v76, 0
    %v95 = vsel %vm88, %v80, 0
    %97 = vmatprep.subr.mxu0 0.0
    %98 = vmatpush1.msra.mxu0 0.0
    %99 = vmatprep.subr.mxu0 0.0
    %100 = vmatpush1.msra.mxu0 0.0
    %101 = vmatprep.subr.mxu0 0.0
    %102 = vmatpush1.msra.mxu0 0.0
    %103 = vmatprep.subr.mxu0 0.0
    %104 = vmatpush1.msra.mxu0 0.0
    %105 = vmatprep.subr.mxu0 0.0
    %106 = vmatpush1.msra.mxu0 0.0
    %107 = vmatprep.subr.mxu0 0.0
    %108 = vmatpush1.msra.mxu0 0.0
    %109 = vmatprep.subr.mxu0 0.0
    %110 = vmatpush1.msra.mxu0 0.0
    %111 = vmatprep.subr.mxu0 0.0
    %112 = vmatpush1.msra.mxu0 0.0
    %113 = vmatprep.subr.mxu0 0.0
    %114 = vmatpush1.msra.mxu0 0.0
    %115 = vmatprep.subr.mxu0 0.0
    %116 = vmatpush1.msra.mxu0 0.0
    %117 = vmatprep.subr.mxu0 0.0
    %118 = vmatpush1.msra.mxu0 0.0
    %119 = vmatprep.subr.mxu0 0.0
    %120 = vmatpush1.msra.mxu0 0.0
    %121 = vmatprep.subr.mxu0 0.0
    %122 = vmatpush1.msra.mxu0 0.0
    %123 = vmatprep.subr.mxu0 0.0
    %124 = vmatpush1.msra.mxu0 0.0
    %125 = vmatprep.subr.mxu0 0.0
    %126 = vmatpush1.msra.mxu0 0.0
    %127 = vmatprep.subr.mxu0 %v91
    %128 = vmatpush1.msra.mxu0 %v89
    %129 = vmatprep.subr.mxu0 0.0
    %130 = vmatpush2.msra.mxu0 0.0
    %131 = vmatprep.subr.mxu0 0.0
    %132 = vmatpush2.msra.mxu0 0.0
    %133 = vmatprep.subr.mxu0 0.0
    %134 = vmatpush2.msra.mxu0 0.0
    %135 = vmatprep.subr.mxu0 0.0
    %136 = vmatpush2.msra.mxu0 0.0
    %137 = vmatprep.subr.mxu0 0.0
    %138 = vmatpush2.msra.mxu0 0.0
    %139 = vmatprep.subr.mxu0 0.0
    %140 = vmatpush2.msra.mxu0 0.0
    %141 = vmatprep.subr.mxu0 0.0
    %142 = vmatpush2.msra.mxu0 0.0
    %143 = vmatprep.subr.mxu0 0.0
    %144 = vmatpush2.msra.mxu0 0.0
    %145 = vmatprep.subr.mxu0 0.0
    %146 = vmatpush2.msra.mxu0 0.0
    %147 = vmatprep.subr.mxu0 0.0
    %148 = vmatpush2.msra.mxu0 0.0
    %149 = vmatprep.subr.mxu0 0.0
    %150 = vmatpush2.msra.mxu0 0.0
    %151 = vmatprep.subr.mxu0 0.0
    %152 = vmatpush2.msra.mxu0 0.0
    %153 = vmatprep.subr.mxu0 0.0
    %154 = vmatpush2.msra.mxu0 0.0
    %155 = vmatprep.subr.mxu0 0.0
    %156 = vmatpush2.msra.mxu0 0.0
    %157 = vmatprep.subr.mxu0 0.0
    %158 = vmatpush2.msra.mxu0 0.0
    %159 = vmatprep.subr.mxu0 0.0
    %160 = vmatpush2.msra.mxu0 0.0
    %161 = vmatprep.mubr.f32.mxu0 0.0
    %162 = vmatmul.mubr.f32.gmra.mxu0 %v83
    %v163 = vpop.f32.mrf.mxu0
    %v164 = vadd.f32 %v47, %v163
    %v165 = vpop.f32.mrf.mxu0
    %v166 = vadd.f32 %v51, %v165
    %167 = vmatprep.mubr.f32.mxu0 0.0
    %168 = vmatmul.mubr.f32.gmra.mxu0 %v86
    %v169 = vpop.f32.mrf.mxu0
    %v170 = vadd.f32 %v47, %v169
    %v171 = vpop.f32.mrf.mxu0
    %v172 = vadd.f32 %v51, %v171
    %173 = vdwg.mxu0
    %174 = vmatprep.subr.mxu0 0.0
    %175 = vmatpush1.msra.mxu0 0.0
    %176 = vmatprep.subr.mxu0 0.0
    %177 = vmatpush1.msra.mxu0 0.0
    %178 = vmatprep.subr.mxu0 0.0
    %179 = vmatpush1.msra.mxu0 0.0
    %180 = vmatprep.subr.mxu0 0.0
    %181 = vmatpush1.msra.mxu0 0.0
    %182 = vmatprep.subr.mxu0 0.0
    %183 = vmatpush1.msra.mxu0 0.0
    %184 = vmatprep.subr.mxu0 0.0
    %185 = vmatpush1.msra.mxu0 0.0
    %186 = vmatprep.subr.mxu0 0.0
    %187 = vmatpush1.msra.mxu0 0.0
    %188 = vmatprep.subr.mxu0 0.0
    %189 = vmatpush1.msra.mxu0 0.0
    %190 = vmatprep.subr.mxu0 0.0
    %191 = vmatpush1.msra.mxu0 0.0
    %192 = vmatprep.subr.mxu0 0.0
    %193 = vmatpush1.msra.mxu0 0.0
    %194 = vmatprep.subr.mxu0 0.0
    %195 = vmatpush1.msra.mxu0 0.0
    %196 = vmatprep.subr.mxu0 0.0
    %197 = vmatpush1.msra.mxu0 0.0
    %198 = vmatprep.subr.mxu0 0.0
    %199 = vmatpush1.msra.mxu0 0.0
    %200 = vmatprep.subr.mxu0 0.0
    %201 = vmatpush1.msra.mxu0 0.0
    %202 = vmatprep.subr.mxu0 0.0
    %203 = vmatpush1.msra.mxu0 0.0
    %204 = vmatprep.subr.mxu0 %v95
    %205 = vmatpush1.msra.mxu0 %v93
    %206 = vmatprep.subr.mxu0 0.0
    %207 = vmatpush2.msra.mxu0 0.0
    %208 = vmatprep.subr.mxu0 0.0
    %209 = vmatpush2.msra.mxu0 0.0
    %210 = vmatprep.subr.mxu0 0.0
    %211 = vmatpush2.msra.mxu0 0.0
    %212 = vmatprep.subr.mxu0 0.0
    %213 = vmatpush2.msra.mxu0 0.0
    %214 = vmatprep.subr.mxu0 0.0
    %215 = vmatpush2.msra.mxu0 0.0
    %216 = vmatprep.subr.mxu0 0.0
    %217 = vmatpush2.msra.mxu0 0.0
    %218 = vmatprep.subr.mxu0 0.0
    %219 = vmatpush2.msra.mxu0 0.0
    %220 = vmatprep.subr.mxu0 0.0
    %221 = vmatpush2.msra.mxu0 0.0
    %222 = vmatprep.subr.mxu0 0.0
    %223 = vmatpush2.msra.mxu0 0.0
    %224 = vmatprep.subr.mxu0 0.0
    %225 = vmatpush2.msra.mxu0 0.0
    %226 = vmatprep.subr.mxu0 0.0
    %227 = vmatpush2.msra.mxu0 0.0
    %228 = vmatprep.subr.mxu0 0.0
    %229 = vmatpush2.msra.mxu0 0.0
    %230 = vmatprep.subr.mxu0 0.0
    %231 = vmatpush2.msra.mxu0 0.0
    %232 = vmatprep.subr.mxu0 0.0
    %233 = vmatpush2.msra.mxu0 0.0
    %234 = vmatprep.subr.mxu0 0.0
    %235 = vmatpush2.msra.mxu0 0.0
    %236 = vmatprep.subr.mxu0 0.0
    %237 = vmatpush2.msra.mxu0 0.0
    %238 = vmatprep.mubr.f32.mxu0 0.0
    %239 = vmatmul.mubr.f32.gmra.mxu0 %v83
    %v240 = vpop.f32.mrf.mxu0
    %v241 = vadd.f32 %v55, %v240
    %v242 = vpop.f32.mrf.mxu0
    %v243 = vadd.f32 %v59, %v242
    %244 = vmatprep.mubr.f32.mxu0 0.0
    %245 = vmatmul.mubr.f32.gmra.mxu0 %v86
    %v246 = vpop.f32.mrf.mxu0
    %v247 = vadd.f32 %v55, %v246
    %v248 = vpop.f32.mrf.mxu0
    %v249 = vadd.f32 %v59, %v248
    %250 = vdwg.mxu0
    %251 = vst [vmem:[#allocation2] sm:$0xff] %v164
    %252 = vst [vmem:[#allocation2 + $0x8] sm:$0xff] %v166
    %253 = vst [vmem:[#allocation2 + $0x10] sm:$0xff] %v241
    %254 = vst [vmem:[#allocation2 + $0x18] sm:$0xff] %v243
    %255 = vst [vmem:[#allocation2 + $0x20] sm:$0xff] %v170
    %256 = vst [vmem:[#allocation2 + $0x28] sm:$0xff] %v172
    %257 = vst [vmem:[#allocation2 + $0x30] sm:$0xff] %v247
    %258 = vst [vmem:[#allocation2 + $0x38] sm:$0xff] %v249
    %v259 = vld [vmem:[#allocation5] sm:$0xff]
    %v260 = vld [vmem:[#allocation5 + $0x8] sm:$0xff]
    %v261 = vld [vmem:[#allocation5 + $0x10] sm:$0xff]
    %v262 = vld [vmem:[#allocation5 + $0x18] sm:$0xff]
    %v263 = vld [vmem:[#allocation5 + $0x20] sm:$0xff]
    %v264 = vld [vmem:[#allocation5 + $0x28] sm:$0xff]
    %v265 = vld [vmem:[#allocation5 + $0x30] sm:$0xff]
    %v266 = vld [vmem:[#allocation5 + $0x38] sm:$0xff]
    %v267 = vld [vmem:[#allocation5 + $0x40] sm:$0xff]
    %v268 = vld [vmem:[#allocation5 + $0x48] sm:$0xff]
    %v269 = vld [vmem:[#allocation5 + $0x50] sm:$0xff]
    %v270 = vld [vmem:[#allocation5 + $0x58] sm:$0xff]
    %v271 = vld [vmem:[#allocation5 + $0x60] sm:$0xff]
    %v272 = vld [vmem:[#allocation5 + $0x68] sm:$0xff]
    %v273 = vld [vmem:[#allocation5 + $0x70] sm:$0xff]
    %v274 = vld [vmem:[#allocation5 + $0x78] sm:$0xff]
    %v275 = vld [vmem:[#allocation5 + $0x80] sm:$0xff]
    %v276 = vld [vmem:[#allocation5 + $0x88] sm:$0xff]
    %v277 = vld [vmem:[#allocation5 + $0x90] sm:$0xff]
    %v278 = vld [vmem:[#allocation5 + $0x98] sm:$0xff]
    %v279 = vld [vmem:[#allocation5 + $0xa0] sm:$0xff]
    %v280 = vld [vmem:[#allocation5 + $0xa8] sm:$0xff]
    %v281 = vld [vmem:[#allocation5 + $0xb0] sm:$0xff]
    %v282 = vld [vmem:[#allocation5 + $0xb8] sm:$0xff]
    %v283 = vld [vmem:[#allocation5 + $0xc0] sm:$0xff]
    %v284 = vld [vmem:[#allocation5 + $0xc8] sm:$0xff]
    %v285 = vld [vmem:[#allocation5 + $0xd0] sm:$0xff]
    %v286 = vld [vmem:[#allocation5 + $0xd8] sm:$0xff]
    %v287 = vld [vmem:[#allocation5 + $0xe0] sm:$0xff]
    %v288 = vld [vmem:[#allocation5 + $0xe8] sm:$0xff]
    %v289 = vld [vmem:[#allocation5 + $0xf0] sm:$0xff]
    %v290 = vld [vmem:[#allocation5 + $0xf8] sm:$0xff]
    %v291 = vld [vmem:[#allocation5 + $0x100] sm:$0xff]
    %v292 = vld [vmem:[#allocation5 + $0x108] sm:$0xff]
    %v293 = vld [vmem:[#allocation5 + $0x110] sm:$0xff]
    %v294 = vld [vmem:[#allocation5 + $0x118] sm:$0xff]
    %v295 = vld [vmem:[#allocation5 + $0x120] sm:$0xff]
    %v296 = vld [vmem:[#allocation5 + $0x128] sm:$0xff]
    %v297 = vld [vmem:[#allocation5 + $0x130] sm:$0xff]
    %v298 = vld [vmem:[#allocation5 + $0x138] sm:$0xff]
    %v299 = vld [vmem:[#allocation5 + $0x140] sm:$0xff]
    %v300 = vld [vmem:[#allocation5 + $0x148] sm:$0xff]
    %v301 = vld [vmem:[#allocation5 + $0x150] sm:$0xff]
    %v302 = vld [vmem:[#allocation5 + $0x158] sm:$0xff]
    %v303 = vld [vmem:[#allocation5 + $0x160] sm:$0xff]
    %v304 = vld [vmem:[#allocation5 + $0x168] sm:$0xff]
    %v305 = vld [vmem:[#allocation5 + $0x170] sm:$0xff]
    %v306 = vld [vmem:[#allocation5 + $0x178] sm:$0xff]
    %v307 = vld [vmem:[#allocation5 + $0x180] sm:$0xff]
    %v308 = vld [vmem:[#allocation5 + $0x188] sm:$0xff]
    %v309 = vld [vmem:[#allocation5 + $0x190] sm:$0xff]
    %v310 = vld [vmem:[#allocation5 + $0x198] sm:$0xff]
    %v311 = vld [vmem:[#allocation5 + $0x1a0] sm:$0xff]
    %v312 = vld [vmem:[#allocation5 + $0x1a8] sm:$0xff]
    %v313 = vld [vmem:[#allocation5 + $0x1b0] sm:$0xff]
    %v314 = vld [vmem:[#allocation5 + $0x1b8] sm:$0xff]
    %v315 = vld [vmem:[#allocation5 + $0x1c0] sm:$0xff]
    %v316 = vld [vmem:[#allocation5 + $0x1c8] sm:$0xff]
    %v317 = vld [vmem:[#allocation5 + $0x1d0] sm:$0xff]
    %v318 = vld [vmem:[#allocation5 + $0x1d8] sm:$0xff]
    %v319 = vld [vmem:[#allocation5 + $0x1e0] sm:$0xff]
    %v320 = vld [vmem:[#allocation5 + $0x1e8] sm:$0xff]
    %v321 = vld [vmem:[#allocation5 + $0x1f0] sm:$0xff]
    %v322 = vld [vmem:[#allocation5 + $0x1f8] sm:$0xff]
    loop: start=0, step=1, limit=2
    $region30: #{tpu_custom_call.1} parent=1 // loop_pre_header
      _
    $region31: #{tpu_custom_call.1} parent=1 // loop_header
      %s324 = sphi 0, %s328
      %p325 = scmp.ge.s32.totalorder %s324, 2
      %v329 = vphi 0.0, %v1728
      %v330 = vphi 0.0, %v1726
    $region32: #{tpu_custom_call.1} parent=1 // loop_header_branch
      %327 = sbr.rel (%p325) target = $region36
    $region33: #{tpu_custom_call.1} parent=1 // loop_body
      %s331 = smul.u32 %s324, 8
      %s332 = sshra.s32 %s331, 3
      %s333 = sand.u32 %s331, 7
      %s334 = smul.u32 %s332, 4
      %s335 = smul.addr %s334, 8
      %s336 = scalar_lea.vmem [#allocation2], %s335
      %v337 = vld [vmem:[%s336] sm:$0xff]
      %v338 = vld [vmem:[%s336 + $0x8] sm:$0xff]
      %v339 = vld [vmem:[%s336 + $0x10] sm:$0xff]
      %v340 = vld [vmem:[%s336 + $0x18] sm:$0xff]
      %341 = vmatprep.subr.mxu0 %v320
      %342 = vmatpush1.msra.mxu0 %v319
      %343 = vmatprep.subr.mxu0 %v316
      %344 = vmatpush1.msra.mxu0 %v315
      %345 = vmatprep.subr.mxu0 %v312
      %346 = vmatpush1.msra.mxu0 %v311
      %347 = vmatprep.subr.mxu0 %v308
      %348 = vmatpush1.msra.mxu0 %v307
      %349 = vmatprep.subr.mxu0 %v304
      %350 = vmatpush1.msra.mxu0 %v303
      %351 = vmatprep.subr.mxu0 %v300
      %352 = vmatpush1.msra.mxu0 %v299
      %353 = vmatprep.subr.mxu0 %v296
      %354 = vmatpush1.msra.mxu0 %v295
      %355 = vmatprep.subr.mxu0 %v292
      %356 = vmatpush1.msra.mxu0 %v291
      %357 = vmatprep.subr.mxu0 %v288
      %358 = vmatpush1.msra.mxu0 %v287
      %359 = vmatprep.subr.mxu0 %v284
      %360 = vmatpush1.msra.mxu0 %v283
      %361 = vmatprep.subr.mxu0 %v280
      %362 = vmatpush1.msra.mxu0 %v279
      %363 = vmatprep.subr.mxu0 %v276
      %364 = vmatpush1.msra.mxu0 %v275
      %365 = vmatprep.subr.mxu0 %v272
      %366 = vmatpush1.msra.mxu0 %v271
      %367 = vmatprep.subr.mxu0 %v268
      %368 = vmatpush1.msra.mxu0 %v267
      %369 = vmatprep.subr.mxu0 %v264
      %370 = vmatpush1.msra.mxu0 %v263
      %371 = vmatprep.subr.mxu0 %v260
      %372 = vmatpush1.msra.mxu0 %v259
      %373 = vmatprep.subr.mxu0 0.0
      %374 = vmatpush2.msra.mxu0 0.0
      %375 = vmatprep.subr.mxu0 0.0
      %376 = vmatpush2.msra.mxu0 0.0
      %377 = vmatprep.subr.mxu0 0.0
      %378 = vmatpush2.msra.mxu0 0.0
      %379 = vmatprep.subr.mxu0 0.0
      %380 = vmatpush2.msra.mxu0 0.0
      %381 = vmatprep.subr.mxu0 0.0
      %382 = vmatpush2.msra.mxu0 0.0
      %383 = vmatprep.subr.mxu0 0.0
      %384 = vmatpush2.msra.mxu0 0.0
      %385 = vmatprep.subr.mxu0 0.0
      %386 = vmatpush2.msra.mxu0 0.0
      %387 = vmatprep.subr.mxu0 0.0
      %388 = vmatpush2.msra.mxu0 0.0
      %389 = vmatprep.subr.mxu0 0.0
      %390 = vmatpush2.msra.mxu0 0.0
      %391 = vmatprep.subr.mxu0 0.0
      %392 = vmatpush2.msra.mxu0 0.0
      %393 = vmatprep.subr.mxu0 0.0
      %394 = vmatpush2.msra.mxu0 0.0
      %395 = vmatprep.subr.mxu0 0.0
      %396 = vmatpush2.msra.mxu0 0.0
      %397 = vmatprep.subr.mxu0 0.0
      %398 = vmatpush2.msra.mxu0 0.0
      %399 = vmatprep.subr.mxu0 0.0
      %400 = vmatpush2.msra.mxu0 0.0
      %401 = vmatprep.subr.mxu0 0.0
      %402 = vmatpush2.msra.mxu0 0.0
      %403 = vmatprep.subr.mxu0 0.0
      %404 = vmatpush2.msra.mxu0 0.0
      %405 = vmatprep.mubr.f32.mxu0 0.0
      %406 = vmatmul.mubr.f32.gmra.mxu0 %v329
      %v407 = vpop.f32.mrf.mxu0
      %v408 = vadd.f32 %v337, %v407
      %v409 = vpop.f32.mrf.mxu0
      %v410 = vadd.f32 %v338, %v409
      %411 = vdwg.mxu0
      %412 = vmatprep.subr.mxu0 %v322
      %413 = vmatpush1.msra.mxu0 %v321
      %414 = vmatprep.subr.mxu0 %v318
      %415 = vmatpush1.msra.mxu0 %v317
      %416 = vmatprep.subr.mxu0 %v314
      %417 = vmatpush1.msra.mxu0 %v313
      %418 = vmatprep.subr.mxu0 %v310
      %419 = vmatpush1.msra.mxu0 %v309
      %420 = vmatprep.subr.mxu0 %v306
      %421 = vmatpush1.msra.mxu0 %v305
      %422 = vmatprep.subr.mxu0 %v302
      %423 = vmatpush1.msra.mxu0 %v301
      %424 = vmatprep.subr.mxu0 %v298
      %425 = vmatpush1.msra.mxu0 %v297
      %426 = vmatprep.subr.mxu0 %v294
      %427 = vmatpush1.msra.mxu0 %v293
      %428 = vmatprep.subr.mxu0 %v290
      %429 = vmatpush1.msra.mxu0 %v289
      %430 = vmatprep.subr.mxu0 %v286
      %431 = vmatpush1.msra.mxu0 %v285
      %432 = vmatprep.subr.mxu0 %v282
      %433 = vmatpush1.msra.mxu0 %v281
      %434 = vmatprep.subr.mxu0 %v278
      %435 = vmatpush1.msra.mxu0 %v277
      %436 = vmatprep.subr.mxu0 %v274
      %437 = vmatpush1.msra.mxu0 %v273
      %438 = vmatprep.subr.mxu0 %v270
      %439 = vmatpush1.msra.mxu0 %v269
      %440 = vmatprep.subr.mxu0 %v266
      %441 = vmatpush1.msra.mxu0 %v265
      %442 = vmatprep.subr.mxu0 %v262
      %443 = vmatpush1.msra.mxu0 %v261
      %444 = vmatprep.subr.mxu0 0.0
      %445 = vmatpush2.msra.mxu0 0.0
      %446 = vmatprep.subr.mxu0 0.0
      %447 = vmatpush2.msra.mxu0 0.0
      %448 = vmatprep.subr.mxu0 0.0
      %449 = vmatpush2.msra.mxu0 0.0
      %450 = vmatprep.subr.mxu0 0.0
      %451 = vmatpush2.msra.mxu0 0.0
      %452 = vmatprep.subr.mxu0 0.0
      %453 = vmatpush2.msra.mxu0 0.0
      %454 = vmatprep.subr.mxu0 0.0
      %455 = vmatpush2.msra.mxu0 0.0
      %456 = vmatprep.subr.mxu0 0.0
      %457 = vmatpush2.msra.mxu0 0.0
      %458 = vmatprep.subr.mxu0 0.0
      %459 = vmatpush2.msra.mxu0 0.0
      %460 = vmatprep.subr.mxu0 0.0
      %461 = vmatpush2.msra.mxu0 0.0
      %462 = vmatprep.subr.mxu0 0.0
      %463 = vmatpush2.msra.mxu0 0.0
      %464 = vmatprep.subr.mxu0 0.0
      %465 = vmatpush2.msra.mxu0 0.0
      %466 = vmatprep.subr.mxu0 0.0
      %467 = vmatpush2.msra.mxu0 0.0
      %468 = vmatprep.subr.mxu0 0.0
      %469 = vmatpush2.msra.mxu0 0.0
      %470 = vmatprep.subr.mxu0 0.0
      %471 = vmatpush2.msra.mxu0 0.0
      %472 = vmatprep.subr.mxu0 0.0
      %473 = vmatpush2.msra.mxu0 0.0
      %474 = vmatprep.subr.mxu0 0.0
      %475 = vmatpush2.msra.mxu0 0.0
      %476 = vmatprep.mubr.f32.mxu0 0.0
      %477 = vmatmul.mubr.f32.gmra.mxu0 %v329
      %v478 = vpop.f32.mrf.mxu0
      %v479 = vadd.f32 %v339, %v478
      %v480 = vpop.f32.mrf.mxu0
      %v481 = vadd.f32 %v340, %v480
      %482 = vdwg.mxu0
      %v483 = vxor.u32 %v408, 2147483648
      %v484 = vxor.u32 %v410, 2147483648
      %v485 = vxor.u32 %v481, 2147483648
      %v486 = vmul.f32 %v483, 1.442695
      %v487 = vpow.pop %v486
      %v488 = vmul.f32 %v484, 1.442695
      %v489 = vpow.pop %v488
      %v490 = vmul.f32 %v485, 1.442695
      %v491 = vpow.pop %v490
      %v492 = vadd.f32 %v487, 1.0
      %v493 = vadd.f32 %v489, 1.0
      %v494 = vadd.f32 %v491, 1.0
      %v495 = vrcp.pop %v492
      %v496 = vmul.f32 1.0, %v495
      %v497 = vrcp.pop %v493
      %v498 = vmul.f32 1.0, %v497
      %v499 = vrcp.pop %v494
      %v500 = vmul.f32 1.0, %v499
      %v501 = vtanh.pop %v479
      %v502 = vmul.f32 %v498, %v330
      %v503 = vmul.f32 %v496, %v501
      %v504 = vadd.f32 %v502, %v503
      %v505 = vtanh.pop %v504
      %v506 = vmul.f32 %v500, %v505
      %v511 = vrot.slane %v337, 1
      %v512 = vrot.slane %v338, 1
      %v513 = vrot.slane %v339, 1
      %v514 = vrot.slane %v340, 1
      %519 = vmatprep.subr.mxu0 %v320
      %520 = vmatpush1.msra.mxu0 %v319
      %521 = vmatprep.subr.mxu0 %v316
      %522 = vmatpush1.msra.mxu0 %v315
      %523 = vmatprep.subr.mxu0 %v312
      %524 = vmatpush1.msra.mxu0 %v311
      %525 = vmatprep.subr.mxu0 %v308
      %526 = vmatpush1.msra.mxu0 %v307
      %527 = vmatprep.subr.mxu0 %v304
      %528 = vmatpush1.msra.mxu0 %v303
      %529 = vmatprep.subr.mxu0 %v300
      %530 = vmatpush1.msra.mxu0 %v299
      %531 = vmatprep.subr.mxu0 %v296
      %532 = vmatpush1.msra.mxu0 %v295
      %533 = vmatprep.subr.mxu0 %v292
      %534 = vmatpush1.msra.mxu0 %v291
      %535 = vmatprep.subr.mxu0 %v288
      %536 = vmatpush1.msra.mxu0 %v287
      %537 = vmatprep.subr.mxu0 %v284
      %538 = vmatpush1.msra.mxu0 %v283
      %539 = vmatprep.subr.mxu0 %v280
      %540 = vmatpush1.msra.mxu0 %v279
      %541 = vmatprep.subr.mxu0 %v276
      %542 = vmatpush1.msra.mxu0 %v275
      %543 = vmatprep.subr.mxu0 %v272
      %544 = vmatpush1.msra.mxu0 %v271
      %545 = vmatprep.subr.mxu0 %v268
      %546 = vmatpush1.msra.mxu0 %v267
      %547 = vmatprep.subr.mxu0 %v264
      %548 = vmatpush1.msra.mxu0 %v263
      %549 = vmatprep.subr.mxu0 %v260
      %550 = vmatpush1.msra.mxu0 %v259
      %551 = vmatprep.subr.mxu0 0.0
      %552 = vmatpush2.msra.mxu0 0.0
      %553 = vmatprep.subr.mxu0 0.0
      %554 = vmatpush2.msra.mxu0 0.0
      %555 = vmatprep.subr.mxu0 0.0
      %556 = vmatpush2.msra.mxu0 0.0
      %557 = vmatprep.subr.mxu0 0.0
      %558 = vmatpush2.msra.mxu0 0.0
      %559 = vmatprep.subr.mxu0 0.0
      %560 = vmatpush2.msra.mxu0 0.0
      %561 = vmatprep.subr.mxu0 0.0
      %562 = vmatpush2.msra.mxu0 0.0
      %563 = vmatprep.subr.mxu0 0.0
      %564 = vmatpush2.msra.mxu0 0.0
      %565 = vmatprep.subr.mxu0 0.0
      %566 = vmatpush2.msra.mxu0 0.0
      %567 = vmatprep.subr.mxu0 0.0
      %568 = vmatpush2.msra.mxu0 0.0
      %569 = vmatprep.subr.mxu0 0.0
      %570 = vmatpush2.msra.mxu0 0.0
      %571 = vmatprep.subr.mxu0 0.0
      %572 = vmatpush2.msra.mxu0 0.0
      %573 = vmatprep.subr.mxu0 0.0
      %574 = vmatpush2.msra.mxu0 0.0
      %575 = vmatprep.subr.mxu0 0.0
      %576 = vmatpush2.msra.mxu0 0.0
      %577 = vmatprep.subr.mxu0 0.0
      %578 = vmatpush2.msra.mxu0 0.0
      %579 = vmatprep.subr.mxu0 0.0
      %580 = vmatpush2.msra.mxu0 0.0
      %581 = vmatprep.subr.mxu0 0.0
      %582 = vmatpush2.msra.mxu0 0.0
      %583 = vmatprep.mubr.f32.mxu0 0.0
      %584 = vmatmul.mubr.f32.gmra.mxu0 %v506
      %v585 = vpop.f32.mrf.mxu0
      %v586 = vadd.f32 %v511, %v585
      %v587 = vpop.f32.mrf.mxu0
      %v588 = vadd.f32 %v512, %v587
      %589 = vdwg.mxu0
      %590 = vmatprep.subr.mxu0 %v322
      %591 = vmatpush1.msra.mxu0 %v321
      %592 = vmatprep.subr.mxu0 %v318
      %593 = vmatpush1.msra.mxu0 %v317
      %594 = vmatprep.subr.mxu0 %v314
      %595 = vmatpush1.msra.mxu0 %v313
      %596 = vmatprep.subr.mxu0 %v310
      %597 = vmatpush1.msra.mxu0 %v309
      %598 = vmatprep.subr.mxu0 %v306
      %599 = vmatpush1.msra.mxu0 %v305
      %600 = vmatprep.subr.mxu0 %v302
      %601 = vmatpush1.msra.mxu0 %v301
      %602 = vmatprep.subr.mxu0 %v298
      %603 = vmatpush1.msra.mxu0 %v297
      %604 = vmatprep.subr.mxu0 %v294
      %605 = vmatpush1.msra.mxu0 %v293
      %606 = vmatprep.subr.mxu0 %v290
      %607 = vmatpush1.msra.mxu0 %v289
      %608 = vmatprep.subr.mxu0 %v286
      %609 = vmatpush1.msra.mxu0 %v285
      %610 = vmatprep.subr.mxu0 %v282
      %611 = vmatpush1.msra.mxu0 %v281
      %612 = vmatprep.subr.mxu0 %v278
      %613 = vmatpush1.msra.mxu0 %v277
      %614 = vmatprep.subr.mxu0 %v274
      %615 = vmatpush1.msra.mxu0 %v273
      %616 = vmatprep.subr.mxu0 %v270
      %617 = vmatpush1.msra.mxu0 %v269
      %618 = vmatprep.subr.mxu0 %v266
      %619 = vmatpush1.msra.mxu0 %v265
      %620 = vmatprep.subr.mxu0 %v262
      %621 = vmatpush1.msra.mxu0 %v261
      %622 = vmatprep.subr.mxu0 0.0
      %623 = vmatpush2.msra.mxu0 0.0
      %624 = vmatprep.subr.mxu0 0.0
      %625 = vmatpush2.msra.mxu0 0.0
      %626 = vmatprep.subr.mxu0 0.0
      %627 = vmatpush2.msra.mxu0 0.0
      %628 = vmatprep.subr.mxu0 0.0
      %629 = vmatpush2.msra.mxu0 0.0
      %630 = vmatprep.subr.mxu0 0.0
      %631 = vmatpush2.msra.mxu0 0.0
      %632 = vmatprep.subr.mxu0 0.0
      %633 = vmatpush2.msra.mxu0 0.0
      %634 = vmatprep.subr.mxu0 0.0
      %635 = vmatpush2.msra.mxu0 0.0
      %636 = vmatprep.subr.mxu0 0.0
      %637 = vmatpush2.msra.mxu0 0.0
      %638 = vmatprep.subr.mxu0 0.0
      %639 = vmatpush2.msra.mxu0 0.0
      %640 = vmatprep.subr.mxu0 0.0
      %641 = vmatpush2.msra.mxu0 0.0
      %642 = vmatprep.subr.mxu0 0.0
      %643 = vmatpush2.msra.mxu0 0.0
      %644 = vmatprep.subr.mxu0 0.0
      %645 = vmatpush2.msra.mxu0 0.0
      %646 = vmatprep.subr.mxu0 0.0
      %647 = vmatpush2.msra.mxu0 0.0
      %648 = vmatprep.subr.mxu0 0.0
      %649 = vmatpush2.msra.mxu0 0.0
      %650 = vmatprep.subr.mxu0 0.0
      %651 = vmatpush2.msra.mxu0 0.0
      %652 = vmatprep.subr.mxu0 0.0
      %653 = vmatpush2.msra.mxu0 0.0
      %654 = vmatprep.mubr.f32.mxu0 0.0
      %655 = vmatmul.mubr.f32.gmra.mxu0 %v506
      %v656 = vpop.f32.mrf.mxu0
      %v657 = vadd.f32 %v513, %v656
      %v658 = vpop.f32.mrf.mxu0
      %v659 = vadd.f32 %v514, %v658
      %660 = vdwg.mxu0
      %v661 = vxor.u32 %v586, 2147483648
      %v662 = vxor.u32 %v588, 2147483648
      %v663 = vxor.u32 %v659, 2147483648
      %v664 = vmul.f32 %v661, 1.442695
      %v665 = vpow.pop %v664
      %v666 = vmul.f32 %v662, 1.442695
      %v667 = vpow.pop %v666
      %v668 = vmul.f32 %v663, 1.442695
      %v669 = vpow.pop %v668
      %v670 = vadd.f32 %v665, 1.0
      %v671 = vadd.f32 %v667, 1.0
      %v672 = vadd.f32 %v669, 1.0
      %v673 = vrcp.pop %v670
      %v674 = vmul.f32 1.0, %v673
      %v675 = vrcp.pop %v671
      %v676 = vmul.f32 1.0, %v675
      %v677 = vrcp.pop %v672
      %v678 = vmul.f32 1.0, %v677
      %v679 = vtanh.pop %v657
      %v680 = vmul.f32 %v676, %v504
      %v681 = vmul.f32 %v674, %v679
      %v682 = vadd.f32 %v680, %v681
      %v683 = vtanh.pop %v682
      %v684 = vmul.f32 %v678, %v683
      %v685 = vrot.slane %v337, 2
      %v686 = vrot.slane %v338, 2
      %v687 = vrot.slane %v339, 2
      %v688 = vrot.slane %v340, 2
      %693 = vmatprep.subr.mxu0 %v320
      %694 = vmatpush1.msra.mxu0 %v319
      %695 = vmatprep.subr.mxu0 %v316
      %696 = vmatpush1.msra.mxu0 %v315
      %697 = vmatprep.subr.mxu0 %v312
      %698 = vmatpush1.msra.mxu0 %v311
      %699 = vmatprep.subr.mxu0 %v308
      %700 = vmatpush1.msra.mxu0 %v307
      %701 = vmatprep.subr.mxu0 %v304
      %702 = vmatpush1.msra.mxu0 %v303
      %703 = vmatprep.subr.mxu0 %v300
      %704 = vmatpush1.msra.mxu0 %v299
      %705 = vmatprep.subr.mxu0 %v296
      %706 = vmatpush1.msra.mxu0 %v295
      %707 = vmatprep.subr.mxu0 %v292
      %708 = vmatpush1.msra.mxu0 %v291
      %709 = vmatprep.subr.mxu0 %v288
      %710 = vmatpush1.msra.mxu0 %v287
      %711 = vmatprep.subr.mxu0 %v284
      %712 = vmatpush1.msra.mxu0 %v283
      %713 = vmatprep.subr.mxu0 %v280
      %714 = vmatpush1.msra.mxu0 %v279
      %715 = vmatprep.subr.mxu0 %v276
      %716 = vmatpush1.msra.mxu0 %v275
      %717 = vmatprep.subr.mxu0 %v272
      %718 = vmatpush1.msra.mxu0 %v271
      %719 = vmatprep.subr.mxu0 %v268
      %720 = vmatpush1.msra.mxu0 %v267
      %721 = vmatprep.subr.mxu0 %v264
      %722 = vmatpush1.msra.mxu0 %v263
      %723 = vmatprep.subr.mxu0 %v260
      %724 = vmatpush1.msra.mxu0 %v259
      %725 = vmatprep.subr.mxu0 0.0
      %726 = vmatpush2.msra.mxu0 0.0
      %727 = vmatprep.subr.mxu0 0.0
      %728 = vmatpush2.msra.mxu0 0.0
      %729 = vmatprep.subr.mxu0 0.0
      %730 = vmatpush2.msra.mxu0 0.0
      %731 = vmatprep.subr.mxu0 0.0
      %732 = vmatpush2.msra.mxu0 0.0
      %733 = vmatprep.subr.mxu0 0.0
      %734 = vmatpush2.msra.mxu0 0.0
      %735 = vmatprep.subr.mxu0 0.0
      %736 = vmatpush2.msra.mxu0 0.0
      %737 = vmatprep.subr.mxu0 0.0
      %738 = vmatpush2.msra.mxu0 0.0
      %739 = vmatprep.subr.mxu0 0.0
      %740 = vmatpush2.msra.mxu0 0.0
      %741 = vmatprep.subr.mxu0 0.0
      %742 = vmatpush2.msra.mxu0 0.0
      %743 = vmatprep.subr.mxu0 0.0
      %744 = vmatpush2.msra.mxu0 0.0
      %745 = vmatprep.subr.mxu0 0.0
      %746 = vmatpush2.msra.mxu0 0.0
      %747 = vmatprep.subr.mxu0 0.0
      %748 = vmatpush2.msra.mxu0 0.0
      %749 = vmatprep.subr.mxu0 0.0
      %750 = vmatpush2.msra.mxu0 0.0
      %751 = vmatprep.subr.mxu0 0.0
      %752 = vmatpush2.msra.mxu0 0.0
      %753 = vmatprep.subr.mxu0 0.0
      %754 = vmatpush2.msra.mxu0 0.0
      %755 = vmatprep.subr.mxu0 0.0
      %756 = vmatpush2.msra.mxu0 0.0
      %757 = vmatprep.mubr.f32.mxu0 0.0
      %758 = vmatmul.mubr.f32.gmra.mxu0 %v684
      %v759 = vpop.f32.mrf.mxu0
      %v760 = vadd.f32 %v685, %v759
      %v761 = vpop.f32.mrf.mxu0
      %v762 = vadd.f32 %v686, %v761
      %763 = vdwg.mxu0
      %764 = vmatprep.subr.mxu0 %v322
      %765 = vmatpush1.msra.mxu0 %v321
      %766 = vmatprep.subr.mxu0 %v318
      %767 = vmatpush1.msra.mxu0 %v317
      %768 = vmatprep.subr.mxu0 %v314
      %769 = vmatpush1.msra.mxu0 %v313
      %770 = vmatprep.subr.mxu0 %v310
      %771 = vmatpush1.msra.mxu0 %v309
      %772 = vmatprep.subr.mxu0 %v306
      %773 = vmatpush1.msra.mxu0 %v305
      %774 = vmatprep.subr.mxu0 %v302
      %775 = vmatpush1.msra.mxu0 %v301
      %776 = vmatprep.subr.mxu0 %v298
      %777 = vmatpush1.msra.mxu0 %v297
      %778 = vmatprep.subr.mxu0 %v294
      %779 = vmatpush1.msra.mxu0 %v293
      %780 = vmatprep.subr.mxu0 %v290
      %781 = vmatpush1.msra.mxu0 %v289
      %782 = vmatprep.subr.mxu0 %v286
      %783 = vmatpush1.msra.mxu0 %v285
      %784 = vmatprep.subr.mxu0 %v282
      %785 = vmatpush1.msra.mxu0 %v281
      %786 = vmatprep.subr.mxu0 %v278
      %787 = vmatpush1.msra.mxu0 %v277
      %788 = vmatprep.subr.mxu0 %v274
      %789 = vmatpush1.msra.mxu0 %v273
      %790 = vmatprep.subr.mxu0 %v270
      %791 = vmatpush1.msra.mxu0 %v269
      %792 = vmatprep.subr.mxu0 %v266
      %793 = vmatpush1.msra.mxu0 %v265
      %794 = vmatprep.subr.mxu0 %v262
      %795 = vmatpush1.msra.mxu0 %v261
      %796 = vmatprep.subr.mxu0 0.0
      %797 = vmatpush2.msra.mxu0 0.0
      %798 = vmatprep.subr.mxu0 0.0
      %799 = vmatpush2.msra.mxu0 0.0
      %800 = vmatprep.subr.mxu0 0.0
      %801 = vmatpush2.msra.mxu0 0.0
      %802 = vmatprep.subr.mxu0 0.0
      %803 = vmatpush2.msra.mxu0 0.0
      %804 = vmatprep.subr.mxu0 0.0
      %805 = vmatpush2.msra.mxu0 0.0
      %806 = vmatprep.subr.mxu0 0.0
      %807 = vmatpush2.msra.mxu0 0.0
      %808 = vmatprep.subr.mxu0 0.0
      %809 = vmatpush2.msra.mxu0 0.0
      %810 = vmatprep.subr.mxu0 0.0
      %811 = vmatpush2.msra.mxu0 0.0
      %812 = vmatprep.subr.mxu0 0.0
      %813 = vmatpush2.msra.mxu0 0.0
      %814 = vmatprep.subr.mxu0 0.0
      %815 = vmatpush2.msra.mxu0 0.0
      %816 = vmatprep.subr.mxu0 0.0
      %817 = vmatpush2.msra.mxu0 0.0
      %818 = vmatprep.subr.mxu0 0.0
      %819 = vmatpush2.msra.mxu0 0.0
      %820 = vmatprep.subr.mxu0 0.0
      %821 = vmatpush2.msra.mxu0 0.0
      %822 = vmatprep.subr.mxu0 0.0
      %823 = vmatpush2.msra.mxu0 0.0
      %824 = vmatprep.subr.mxu0 0.0
      %825 = vmatpush2.msra.mxu0 0.0
      %826 = vmatprep.subr.mxu0 0.0
      %827 = vmatpush2.msra.mxu0 0.0
      %828 = vmatprep.mubr.f32.mxu0 0.0
      %829 = vmatmul.mubr.f32.gmra.mxu0 %v684
      %v830 = vpop.f32.mrf.mxu0
      %v831 = vadd.f32 %v687, %v830
      %v832 = vpop.f32.mrf.mxu0
      %v833 = vadd.f32 %v688, %v832
      %834 = vdwg.mxu0
      %v835 = vxor.u32 %v760, 2147483648
      %v836 = vxor.u32 %v762, 2147483648
      %v837 = vxor.u32 %v833, 2147483648
      %v838 = vmul.f32 %v835, 1.442695
      %v839 = vpow.pop %v838
      %v840 = vmul.f32 %v836, 1.442695
      %v841 = vpow.pop %v840
      %v842 = vmul.f32 %v837, 1.442695
      %v843 = vpow.pop %v842
      %v844 = vadd.f32 %v839, 1.0
      %v845 = vadd.f32 %v841, 1.0
      %v846 = vadd.f32 %v843, 1.0
      %v847 = vrcp.pop %v844
      %v848 = vmul.f32 1.0, %v847
      %v849 = vrcp.pop %v845
      %v850 = vmul.f32 1.0, %v849
      %v851 = vrcp.pop %v846
      %v852 = vmul.f32 1.0, %v851
      %v853 = vtanh.pop %v831
      %v854 = vmul.f32 %v850, %v682
      %v855 = vmul.f32 %v848, %v853
      %v856 = vadd.f32 %v854, %v855
      %v857 = vtanh.pop %v856
      %v858 = vmul.f32 %v852, %v857
      %v859 = vrot.slane %v337, 3
      %v860 = vrot.slane %v338, 3
      %v861 = vrot.slane %v339, 3
      %v862 = vrot.slane %v340, 3
      %867 = vmatprep.subr.mxu0 %v320
      %868 = vmatpush1.msra.mxu0 %v319
      %869 = vmatprep.subr.mxu0 %v316
      %870 = vmatpush1.msra.mxu0 %v315
      %871 = vmatprep.subr.mxu0 %v312
      %872 = vmatpush1.msra.mxu0 %v311
      %873 = vmatprep.subr.mxu0 %v308
      %874 = vmatpush1.msra.mxu0 %v307
      %875 = vmatprep.subr.mxu0 %v304
      %876 = vmatpush1.msra.mxu0 %v303
      %877 = vmatprep.subr.mxu0 %v300
      %878 = vmatpush1.msra.mxu0 %v299
      %879 = vmatprep.subr.mxu0 %v296
      %880 = vmatpush1.msra.mxu0 %v295
      %881 = vmatprep.subr.mxu0 %v292
      %882 = vmatpush1.msra.mxu0 %v291
      %883 = vmatprep.subr.mxu0 %v288
      %884 = vmatpush1.msra.mxu0 %v287
      %885 = vmatprep.subr.mxu0 %v284
      %886 = vmatpush1.msra.mxu0 %v283
      %887 = vmatprep.subr.mxu0 %v280
      %888 = vmatpush1.msra.mxu0 %v279
      %889 = vmatprep.subr.mxu0 %v276
      %890 = vmatpush1.msra.mxu0 %v275
      %891 = vmatprep.subr.mxu0 %v272
      %892 = vmatpush1.msra.mxu0 %v271
      %893 = vmatprep.subr.mxu0 %v268
      %894 = vmatpush1.msra.mxu0 %v267
      %895 = vmatprep.subr.mxu0 %v264
      %896 = vmatpush1.msra.mxu0 %v263
      %897 = vmatprep.subr.mxu0 %v260
      %898 = vmatpush1.msra.mxu0 %v259
      %899 = vmatprep.subr.mxu0 0.0
      %900 = vmatpush2.msra.mxu0 0.0
      %901 = vmatprep.subr.mxu0 0.0
      %902 = vmatpush2.msra.mxu0 0.0
      %903 = vmatprep.subr.mxu0 0.0
      %904 = vmatpush2.msra.mxu0 0.0
      %905 = vmatprep.subr.mxu0 0.0
      %906 = vmatpush2.msra.mxu0 0.0
      %907 = vmatprep.subr.mxu0 0.0
      %908 = vmatpush2.msra.mxu0 0.0
      %909 = vmatprep.subr.mxu0 0.0
      %910 = vmatpush2.msra.mxu0 0.0
      %911 = vmatprep.subr.mxu0 0.0
      %912 = vmatpush2.msra.mxu0 0.0
      %913 = vmatprep.subr.mxu0 0.0
      %914 = vmatpush2.msra.mxu0 0.0
      %915 = vmatprep.subr.mxu0 0.0
      %916 = vmatpush2.msra.mxu0 0.0
      %917 = vmatprep.subr.mxu0 0.0
      %918 = vmatpush2.msra.mxu0 0.0
      %919 = vmatprep.subr.mxu0 0.0
      %920 = vmatpush2.msra.mxu0 0.0
      %921 = vmatprep.subr.mxu0 0.0
      %922 = vmatpush2.msra.mxu0 0.0
      %923 = vmatprep.subr.mxu0 0.0
      %924 = vmatpush2.msra.mxu0 0.0
      %925 = vmatprep.subr.mxu0 0.0
      %926 = vmatpush2.msra.mxu0 0.0
      %927 = vmatprep.subr.mxu0 0.0
      %928 = vmatpush2.msra.mxu0 0.0
      %929 = vmatprep.subr.mxu0 0.0
      %930 = vmatpush2.msra.mxu0 0.0
      %931 = vmatprep.mubr.f32.mxu0 0.0
      %932 = vmatmul.mubr.f32.gmra.mxu0 %v858
      %v933 = vpop.f32.mrf.mxu0
      %v934 = vadd.f32 %v859, %v933
      %v935 = vpop.f32.mrf.mxu0
      %v936 = vadd.f32 %v860, %v935
      %937 = vdwg.mxu0
      %938 = vmatprep.subr.mxu0 %v322
      %939 = vmatpush1.msra.mxu0 %v321
      %940 = vmatprep.subr.mxu0 %v318
      %941 = vmatpush1.msra.mxu0 %v317
      %942 = vmatprep.subr.mxu0 %v314
      %943 = vmatpush1.msra.mxu0 %v313
      %944 = vmatprep.subr.mxu0 %v310
      %945 = vmatpush1.msra.mxu0 %v309
      %946 = vmatprep.subr.mxu0 %v306
      %947 = vmatpush1.msra.mxu0 %v305
      %948 = vmatprep.subr.mxu0 %v302
      %949 = vmatpush1.msra.mxu0 %v301
      %950 = vmatprep.subr.mxu0 %v298
      %951 = vmatpush1.msra.mxu0 %v297
      %952 = vmatprep.subr.mxu0 %v294
      %953 = vmatpush1.msra.mxu0 %v293
      %954 = vmatprep.subr.mxu0 %v290
      %955 = vmatpush1.msra.mxu0 %v289
      %956 = vmatprep.subr.mxu0 %v286
      %957 = vmatpush1.msra.mxu0 %v285
      %958 = vmatprep.subr.mxu0 %v282
      %959 = vmatpush1.msra.mxu0 %v281
      %960 = vmatprep.subr.mxu0 %v278
      %961 = vmatpush1.msra.mxu0 %v277
      %962 = vmatprep.subr.mxu0 %v274
      %963 = vmatpush1.msra.mxu0 %v273
      %964 = vmatprep.subr.mxu0 %v270
      %965 = vmatpush1.msra.mxu0 %v269
      %966 = vmatprep.subr.mxu0 %v266
      %967 = vmatpush1.msra.mxu0 %v265
      %968 = vmatprep.subr.mxu0 %v262
      %969 = vmatpush1.msra.mxu0 %v261
      %970 = vmatprep.subr.mxu0 0.0
      %971 = vmatpush2.msra.mxu0 0.0
      %972 = vmatprep.subr.mxu0 0.0
      %973 = vmatpush2.msra.mxu0 0.0
      %974 = vmatprep.subr.mxu0 0.0
      %975 = vmatpush2.msra.mxu0 0.0
      %976 = vmatprep.subr.mxu0 0.0
      %977 = vmatpush2.msra.mxu0 0.0
      %978 = vmatprep.subr.mxu0 0.0
      %979 = vmatpush2.msra.mxu0 0.0
      %980 = vmatprep.subr.mxu0 0.0
      %981 = vmatpush2.msra.mxu0 0.0
      %982 = vmatprep.subr.mxu0 0.0
      %983 = vmatpush2.msra.mxu0 0.0
      %984 = vmatprep.subr.mxu0 0.0
      %985 = vmatpush2.msra.mxu0 0.0
      %986 = vmatprep.subr.mxu0 0.0
      %987 = vmatpush2.msra.mxu0 0.0
      %988 = vmatprep.subr.mxu0 0.0
      %989 = vmatpush2.msra.mxu0 0.0
      %990 = vmatprep.subr.mxu0 0.0
      %991 = vmatpush2.msra.mxu0 0.0
      %992 = vmatprep.subr.mxu0 0.0
      %993 = vmatpush2.msra.mxu0 0.0
      %994 = vmatprep.subr.mxu0 0.0
      %995 = vmatpush2.msra.mxu0 0.0
      %996 = vmatprep.subr.mxu0 0.0
      %997 = vmatpush2.msra.mxu0 0.0
      %998 = vmatprep.subr.mxu0 0.0
      %999 = vmatpush2.msra.mxu0 0.0
      %1000 = vmatprep.subr.mxu0 0.0
      %1001 = vmatpush2.msra.mxu0 0.0
      %1002 = vmatprep.mubr.f32.mxu0 0.0
      %1003 = vmatmul.mubr.f32.gmra.mxu0 %v858
      %v1004 = vpop.f32.mrf.mxu0
      %v1005 = vadd.f32 %v861, %v1004
      %v1006 = vpop.f32.mrf.mxu0
      %v1007 = vadd.f32 %v862, %v1006
      %1008 = vdwg.mxu0
      %v1009 = vxor.u32 %v934, 2147483648
      %v1010 = vxor.u32 %v936, 2147483648
      %v1011 = vxor.u32 %v1007, 2147483648
      %v1012 = vmul.f32 %v1009, 1.442695
      %v1013 = vpow.pop %v1012
      %v1014 = vmul.f32 %v1010, 1.442695
      %v1015 = vpow.pop %v1014
      %v1016 = vmul.f32 %v1011, 1.442695
      %v1017 = vpow.pop %v1016
      %v1018 = vadd.f32 %v1013, 1.0
      %v1019 = vadd.f32 %v1015, 1.0
      %v1020 = vadd.f32 %v1017, 1.0
      %v1021 = vrcp.pop %v1018
      %v1022 = vmul.f32 1.0, %v1021
      %v1023 = vrcp.pop %v1019
      %v1024 = vmul.f32 1.0, %v1023
      %v1025 = vrcp.pop %v1020
      %v1026 = vmul.f32 1.0, %v1025
      %v1027 = vtanh.pop %v1005
      %v1028 = vmul.f32 %v1024, %v856
      %v1029 = vmul.f32 %v1022, %v1027
      %v1030 = vadd.f32 %v1028, %v1029
      %v1031 = vtanh.pop %v1030
      %v1032 = vmul.f32 %v1026, %v1031
      %v1033 = vrot.slane %v337, 4
      %v1034 = vrot.slane %v338, 4
      %v1035 = vrot.slane %v339, 4
      %v1036 = vrot.slane %v340, 4
      %1041 = vmatprep.subr.mxu0 %v320
      %1042 = vmatpush1.msra.mxu0 %v319
      %1043 = vmatprep.subr.mxu0 %v316
      %1044 = vmatpush1.msra.mxu0 %v315
      %1045 = vmatprep.subr.mxu0 %v312
      %1046 = vmatpush1.msra.mxu0 %v311
      %1047 = vmatprep.subr.mxu0 %v308
      %1048 = vmatpush1.msra.mxu0 %v307
      %1049 = vmatprep.subr.mxu0 %v304
      %1050 = vmatpush1.msra.mxu0 %v303
      %1051 = vmatprep.subr.mxu0 %v300
      %1052 = vmatpush1.msra.mxu0 %v299
      %1053 = vmatprep.subr.mxu0 %v296
      %1054 = vmatpush1.msra.mxu0 %v295
      %1055 = vmatprep.subr.mxu0 %v292
      %1056 = vmatpush1.msra.mxu0 %v291
      %1057 = vmatprep.subr.mxu0 %v288
      %1058 = vmatpush1.msra.mxu0 %v287
      %1059 = vmatprep.subr.mxu0 %v284
      %1060 = vmatpush1.msra.mxu0 %v283
      %1061 = vmatprep.subr.mxu0 %v280
      %1062 = vmatpush1.msra.mxu0 %v279
      %1063 = vmatprep.subr.mxu0 %v276
      %1064 = vmatpush1.msra.mxu0 %v275
      %1065 = vmatprep.subr.mxu0 %v272
      %1066 = vmatpush1.msra.mxu0 %v271
      %1067 = vmatprep.subr.mxu0 %v268
      %1068 = vmatpush1.msra.mxu0 %v267
      %1069 = vmatprep.subr.mxu0 %v264
      %1070 = vmatpush1.msra.mxu0 %v263
      %1071 = vmatprep.subr.mxu0 %v260
      %1072 = vmatpush1.msra.mxu0 %v259
      %1073 = vmatprep.subr.mxu0 0.0
      %1074 = vmatpush2.msra.mxu0 0.0
      %1075 = vmatprep.subr.mxu0 0.0
      %1076 = vmatpush2.msra.mxu0 0.0
      %1077 = vmatprep.subr.mxu0 0.0
      %1078 = vmatpush2.msra.mxu0 0.0
      %1079 = vmatprep.subr.mxu0 0.0
      %1080 = vmatpush2.msra.mxu0 0.0
      %1081 = vmatprep.subr.mxu0 0.0
      %1082 = vmatpush2.msra.mxu0 0.0
      %1083 = vmatprep.subr.mxu0 0.0
      %1084 = vmatpush2.msra.mxu0 0.0
      %1085 = vmatprep.subr.mxu0 0.0
      %1086 = vmatpush2.msra.mxu0 0.0
      %1087 = vmatprep.subr.mxu0 0.0
      %1088 = vmatpush2.msra.mxu0 0.0
      %1089 = vmatprep.subr.mxu0 0.0
      %1090 = vmatpush2.msra.mxu0 0.0
      %1091 = vmatprep.subr.mxu0 0.0
      %1092 = vmatpush2.msra.mxu0 0.0
      %1093 = vmatprep.subr.mxu0 0.0
      %1094 = vmatpush2.msra.mxu0 0.0
      %1095 = vmatprep.subr.mxu0 0.0
      %1096 = vmatpush2.msra.mxu0 0.0
      %1097 = vmatprep.subr.mxu0 0.0
      %1098 = vmatpush2.msra.mxu0 0.0
      %1099 = vmatprep.subr.mxu0 0.0
      %1100 = vmatpush2.msra.mxu0 0.0
      %1101 = vmatprep.subr.mxu0 0.0
      %1102 = vmatpush2.msra.mxu0 0.0
      %1103 = vmatprep.subr.mxu0 0.0
      %1104 = vmatpush2.msra.mxu0 0.0
      %1105 = vmatprep.mubr.f32.mxu0 0.0
      %1106 = vmatmul.mubr.f32.gmra.mxu0 %v1032
      %v1107 = vpop.f32.mrf.mxu0
      %v1108 = vadd.f32 %v1033, %v1107
      %v1109 = vpop.f32.mrf.mxu0
      %v1110 = vadd.f32 %v1034, %v1109
      %1111 = vdwg.mxu0
      %1112 = vmatprep.subr.mxu0 %v322
      %1113 = vmatpush1.msra.mxu0 %v321
      %1114 = vmatprep.subr.mxu0 %v318
      %1115 = vmatpush1.msra.mxu0 %v317
      %1116 = vmatprep.subr.mxu0 %v314
      %1117 = vmatpush1.msra.mxu0 %v313
      %1118 = vmatprep.subr.mxu0 %v310
      %1119 = vmatpush1.msra.mxu0 %v309
      %1120 = vmatprep.subr.mxu0 %v306
      %1121 = vmatpush1.msra.mxu0 %v305
      %1122 = vmatprep.subr.mxu0 %v302
      %1123 = vmatpush1.msra.mxu0 %v301
      %1124 = vmatprep.subr.mxu0 %v298
      %1125 = vmatpush1.msra.mxu0 %v297
      %1126 = vmatprep.subr.mxu0 %v294
      %1127 = vmatpush1.msra.mxu0 %v293
      %1128 = vmatprep.subr.mxu0 %v290
      %1129 = vmatpush1.msra.mxu0 %v289
      %1130 = vmatprep.subr.mxu0 %v286
      %1131 = vmatpush1.msra.mxu0 %v285
      %1132 = vmatprep.subr.mxu0 %v282
      %1133 = vmatpush1.msra.mxu0 %v281
      %1134 = vmatprep.subr.mxu0 %v278
      %1135 = vmatpush1.msra.mxu0 %v277
      %1136 = vmatprep.subr.mxu0 %v274
      %1137 = vmatpush1.msra.mxu0 %v273
      %1138 = vmatprep.subr.mxu0 %v270
      %1139 = vmatpush1.msra.mxu0 %v269
      %1140 = vmatprep.subr.mxu0 %v266
      %1141 = vmatpush1.msra.mxu0 %v265
      %1142 = vmatprep.subr.mxu0 %v262
      %1143 = vmatpush1.msra.mxu0 %v261
      %1144 = vmatprep.subr.mxu0 0.0
      %1145 = vmatpush2.msra.mxu0 0.0
      %1146 = vmatprep.subr.mxu0 0.0
      %1147 = vmatpush2.msra.mxu0 0.0
      %1148 = vmatprep.subr.mxu0 0.0
      %1149 = vmatpush2.msra.mxu0 0.0
      %1150 = vmatprep.subr.mxu0 0.0
      %1151 = vmatpush2.msra.mxu0 0.0
      %1152 = vmatprep.subr.mxu0 0.0
      %1153 = vmatpush2.msra.mxu0 0.0
      %1154 = vmatprep.subr.mxu0 0.0
      %1155 = vmatpush2.msra.mxu0 0.0
      %1156 = vmatprep.subr.mxu0 0.0
      %1157 = vmatpush2.msra.mxu0 0.0
      %1158 = vmatprep.subr.mxu0 0.0
      %1159 = vmatpush2.msra.mxu0 0.0
      %1160 = vmatprep.subr.mxu0 0.0
      %1161 = vmatpush2.msra.mxu0 0.0
      %1162 = vmatprep.subr.mxu0 0.0
      %1163 = vmatpush2.msra.mxu0 0.0
      %1164 = vmatprep.subr.mxu0 0.0
      %1165 = vmatpush2.msra.mxu0 0.0
      %1166 = vmatprep.subr.mxu0 0.0
      %1167 = vmatpush2.msra.mxu0 0.0
      %1168 = vmatprep.subr.mxu0 0.0
      %1169 = vmatpush2.msra.mxu0 0.0
      %1170 = vmatprep.subr.mxu0 0.0
      %1171 = vmatpush2.msra.mxu0 0.0
      %1172 = vmatprep.subr.mxu0 0.0
      %1173 = vmatpush2.msra.mxu0 0.0
      %1174 = vmatprep.subr.mxu0 0.0
      %1175 = vmatpush2.msra.mxu0 0.0
      %1176 = vmatprep.mubr.f32.mxu0 0.0
      %1177 = vmatmul.mubr.f32.gmra.mxu0 %v1032
      %v1178 = vpop.f32.mrf.mxu0
      %v1179 = vadd.f32 %v1035, %v1178
      %v1180 = vpop.f32.mrf.mxu0
      %v1181 = vadd.f32 %v1036, %v1180
      %1182 = vdwg.mxu0
      %v1183 = vxor.u32 %v1108, 2147483648
      %v1184 = vxor.u32 %v1110, 2147483648
      %v1185 = vxor.u32 %v1181, 2147483648
      %v1186 = vmul.f32 %v1183, 1.442695
      %v1187 = vpow.pop %v1186
      %v1188 = vmul.f32 %v1184, 1.442695
      %v1189 = vpow.pop %v1188
      %v1190 = vmul.f32 %v1185, 1.442695
      %v1191 = vpow.pop %v1190
      %v1192 = vadd.f32 %v1187, 1.0
      %v1193 = vadd.f32 %v1189, 1.0
      %v1194 = vadd.f32 %v1191, 1.0
      %v1195 = vrcp.pop %v1192
      %v1196 = vmul.f32 1.0, %v1195
      %v1197 = vrcp.pop %v1193
      %v1198 = vmul.f32 1.0, %v1197
      %v1199 = vrcp.pop %v1194
      %v1200 = vmul.f32 1.0, %v1199
      %v1201 = vtanh.pop %v1179
      %v1202 = vmul.f32 %v1198, %v1030
      %v1203 = vmul.f32 %v1196, %v1201
      %v1204 = vadd.f32 %v1202, %v1203
      %v1205 = vtanh.pop %v1204
      %v1206 = vmul.f32 %v1200, %v1205
      %v1207 = vrot.slane %v337, 5
      %v1208 = vrot.slane %v338, 5
      %v1209 = vrot.slane %v339, 5
      %v1210 = vrot.slane %v340, 5
      %1215 = vmatprep.subr.mxu0 %v320
      %1216 = vmatpush1.msra.mxu0 %v319
      %1217 = vmatprep.subr.mxu0 %v316
      %1218 = vmatpush1.msra.mxu0 %v315
      %1219 = vmatprep.subr.mxu0 %v312
      %1220 = vmatpush1.msra.mxu0 %v311
      %1221 = vmatprep.subr.mxu0 %v308
      %1222 = vmatpush1.msra.mxu0 %v307
      %1223 = vmatprep.subr.mxu0 %v304
      %1224 = vmatpush1.msra.mxu0 %v303
      %1225 = vmatprep.subr.mxu0 %v300
      %1226 = vmatpush1.msra.mxu0 %v299
      %1227 = vmatprep.subr.mxu0 %v296
      %1228 = vmatpush1.msra.mxu0 %v295
      %1229 = vmatprep.subr.mxu0 %v292
      %1230 = vmatpush1.msra.mxu0 %v291
      %1231 = vmatprep.subr.mxu0 %v288
      %1232 = vmatpush1.msra.mxu0 %v287
      %1233 = vmatprep.subr.mxu0 %v284
      %1234 = vmatpush1.msra.mxu0 %v283
      %1235 = vmatprep.subr.mxu0 %v280
      %1236 = vmatpush1.msra.mxu0 %v279
      %1237 = vmatprep.subr.mxu0 %v276
      %1238 = vmatpush1.msra.mxu0 %v275
      %1239 = vmatprep.subr.mxu0 %v272
      %1240 = vmatpush1.msra.mxu0 %v271
      %1241 = vmatprep.subr.mxu0 %v268
      %1242 = vmatpush1.msra.mxu0 %v267
      %1243 = vmatprep.subr.mxu0 %v264
      %1244 = vmatpush1.msra.mxu0 %v263
      %1245 = vmatprep.subr.mxu0 %v260
      %1246 = vmatpush1.msra.mxu0 %v259
      %1247 = vmatprep.subr.mxu0 0.0
      %1248 = vmatpush2.msra.mxu0 0.0
      %1249 = vmatprep.subr.mxu0 0.0
      %1250 = vmatpush2.msra.mxu0 0.0
      %1251 = vmatprep.subr.mxu0 0.0
      %1252 = vmatpush2.msra.mxu0 0.0
      %1253 = vmatprep.subr.mxu0 0.0
      %1254 = vmatpush2.msra.mxu0 0.0
      %1255 = vmatprep.subr.mxu0 0.0
      %1256 = vmatpush2.msra.mxu0 0.0
      %1257 = vmatprep.subr.mxu0 0.0
      %1258 = vmatpush2.msra.mxu0 0.0
      %1259 = vmatprep.subr.mxu0 0.0
      %1260 = vmatpush2.msra.mxu0 0.0
      %1261 = vmatprep.subr.mxu0 0.0
      %1262 = vmatpush2.msra.mxu0 0.0
      %1263 = vmatprep.subr.mxu0 0.0
      %1264 = vmatpush2.msra.mxu0 0.0
      %1265 = vmatprep.subr.mxu0 0.0
      %1266 = vmatpush2.msra.mxu0 0.0
      %1267 = vmatprep.subr.mxu0 0.0
      %1268 = vmatpush2.msra.mxu0 0.0
      %1269 = vmatprep.subr.mxu0 0.0
      %1270 = vmatpush2.msra.mxu0 0.0
      %1271 = vmatprep.subr.mxu0 0.0
      %1272 = vmatpush2.msra.mxu0 0.0
      %1273 = vmatprep.subr.mxu0 0.0
      %1274 = vmatpush2.msra.mxu0 0.0
      %1275 = vmatprep.subr.mxu0 0.0
      %1276 = vmatpush2.msra.mxu0 0.0
      %1277 = vmatprep.subr.mxu0 0.0
      %1278 = vmatpush2.msra.mxu0 0.0
      %1279 = vmatprep.mubr.f32.mxu0 0.0
      %1280 = vmatmul.mubr.f32.gmra.mxu0 %v1206
      %v1281 = vpop.f32.mrf.mxu0
      %v1282 = vadd.f32 %v1207, %v1281
      %v1283 = vpop.f32.mrf.mxu0
      %v1284 = vadd.f32 %v1208, %v1283
      %1285 = vdwg.mxu0
      %1286 = vmatprep.subr.mxu0 %v322
      %1287 = vmatpush1.msra.mxu0 %v321
      %1288 = vmatprep.subr.mxu0 %v318
      %1289 = vmatpush1.msra.mxu0 %v317
      %1290 = vmatprep.subr.mxu0 %v314
      %1291 = vmatpush1.msra.mxu0 %v313
      %1292 = vmatprep.subr.mxu0 %v310
      %1293 = vmatpush1.msra.mxu0 %v309
      %1294 = vmatprep.subr.mxu0 %v306
      %1295 = vmatpush1.msra.mxu0 %v305
      %1296 = vmatprep.subr.mxu0 %v302
      %1297 = vmatpush1.msra.mxu0 %v301
      %1298 = vmatprep.subr.mxu0 %v298
      %1299 = vmatpush1.msra.mxu0 %v297
      %1300 = vmatprep.subr.mxu0 %v294
      %1301 = vmatpush1.msra.mxu0 %v293
      %1302 = vmatprep.subr.mxu0 %v290
      %1303 = vmatpush1.msra.mxu0 %v289
      %1304 = vmatprep.subr.mxu0 %v286
      %1305 = vmatpush1.msra.mxu0 %v285
      %1306 = vmatprep.subr.mxu0 %v282
      %1307 = vmatpush1.msra.mxu0 %v281
      %1308 = vmatprep.subr.mxu0 %v278
      %1309 = vmatpush1.msra.mxu0 %v277
      %1310 = vmatprep.subr.mxu0 %v274
      %1311 = vmatpush1.msra.mxu0 %v273
      %1312 = vmatprep.subr.mxu0 %v270
      %1313 = vmatpush1.msra.mxu0 %v269
      %1314 = vmatprep.subr.mxu0 %v266
      %1315 = vmatpush1.msra.mxu0 %v265
      %1316 = vmatprep.subr.mxu0 %v262
      %1317 = vmatpush1.msra.mxu0 %v261
      %1318 = vmatprep.subr.mxu0 0.0
      %1319 = vmatpush2.msra.mxu0 0.0
      %1320 = vmatprep.subr.mxu0 0.0
      %1321 = vmatpush2.msra.mxu0 0.0
      %1322 = vmatprep.subr.mxu0 0.0
      %1323 = vmatpush2.msra.mxu0 0.0
      %1324 = vmatprep.subr.mxu0 0.0
      %1325 = vmatpush2.msra.mxu0 0.0
      %1326 = vmatprep.subr.mxu0 0.0
      %1327 = vmatpush2.msra.mxu0 0.0
      %1328 = vmatprep.subr.mxu0 0.0
      %1329 = vmatpush2.msra.mxu0 0.0
      %1330 = vmatprep.subr.mxu0 0.0
      %1331 = vmatpush2.msra.mxu0 0.0
      %1332 = vmatprep.subr.mxu0 0.0
      %1333 = vmatpush2.msra.mxu0 0.0
      %1334 = vmatprep.subr.mxu0 0.0
      %1335 = vmatpush2.msra.mxu0 0.0
      %1336 = vmatprep.subr.mxu0 0.0
      %1337 = vmatpush2.msra.mxu0 0.0
      %1338 = vmatprep.subr.mxu0 0.0
      %1339 = vmatpush2.msra.mxu0 0.0
      %1340 = vmatprep.subr.mxu0 0.0
      %1341 = vmatpush2.msra.mxu0 0.0
      %1342 = vmatprep.subr.mxu0 0.0
      %1343 = vmatpush2.msra.mxu0 0.0
      %1344 = vmatprep.subr.mxu0 0.0
      %1345 = vmatpush2.msra.mxu0 0.0
      %1346 = vmatprep.subr.mxu0 0.0
      %1347 = vmatpush2.msra.mxu0 0.0
      %1348 = vmatprep.subr.mxu0 0.0
      %1349 = vmatpush2.msra.mxu0 0.0
      %1350 = vmatprep.mubr.f32.mxu0 0.0
      %1351 = vmatmul.mubr.f32.gmra.mxu0 %v1206
      %v1352 = vpop.f32.mrf.mxu0
      %v1353 = vadd.f32 %v1209, %v1352
      %v1354 = vpop.f32.mrf.mxu0
      %v1355 = vadd.f32 %v1210, %v1354
      %1356 = vdwg.mxu0
      %v1357 = vxor.u32 %v1282, 2147483648
      %v1358 = vxor.u32 %v1284, 2147483648
      %v1359 = vxor.u32 %v1355, 2147483648
      %v1360 = vmul.f32 %v1357, 1.442695
      %v1361 = vpow.pop %v1360
      %v1362 = vmul.f32 %v1358, 1.442695
      %v1363 = vpow.pop %v1362
      %v1364 = vmul.f32 %v1359, 1.442695
      %v1365 = vpow.pop %v1364
      %v1366 = vadd.f32 %v1361, 1.0
      %v1367 = vadd.f32 %v1363, 1.0
      %v1368 = vadd.f32 %v1365, 1.0
      %v1369 = vrcp.pop %v1366
      %v1370 = vmul.f32 1.0, %v1369
      %v1371 = vrcp.pop %v1367
      %v1372 = vmul.f32 1.0, %v1371
      %v1373 = vrcp.pop %v1368
      %v1374 = vmul.f32 1.0, %v1373
      %v1375 = vtanh.pop %v1353
      %v1376 = vmul.f32 %v1372, %v1204
      %v1377 = vmul.f32 %v1370, %v1375
      %v1378 = vadd.f32 %v1376, %v1377
      %v1379 = vtanh.pop %v1378
      %v1380 = vmul.f32 %v1374, %v1379
      %v1381 = vrot.slane %v337, 6
      %v1382 = vrot.slane %v338, 6
      %v1383 = vrot.slane %v339, 6
      %v1384 = vrot.slane %v340, 6
      %1389 = vmatprep.subr.mxu0 %v320
      %1390 = vmatpush1.msra.mxu0 %v319
      %1391 = vmatprep.subr.mxu0 %v316
      %1392 = vmatpush1.msra.mxu0 %v315
      %1393 = vmatprep.subr.mxu0 %v312
      %1394 = vmatpush1.msra.mxu0 %v311
      %1395 = vmatprep.subr.mxu0 %v308
      %1396 = vmatpush1.msra.mxu0 %v307
      %1397 = vmatprep.subr.mxu0 %v304
      %1398 = vmatpush1.msra.mxu0 %v303
      %1399 = vmatprep.subr.mxu0 %v300
      %1400 = vmatpush1.msra.mxu0 %v299
      %1401 = vmatprep.subr.mxu0 %v296
      %1402 = vmatpush1.msra.mxu0 %v295
      %1403 = vmatprep.subr.mxu0 %v292
      %1404 = vmatpush1.msra.mxu0 %v291
      %1405 = vmatprep.subr.mxu0 %v288
      %1406 = vmatpush1.msra.mxu0 %v287
      %1407 = vmatprep.subr.mxu0 %v284
      %1408 = vmatpush1.msra.mxu0 %v283
      %1409 = vmatprep.subr.mxu0 %v280
      %1410 = vmatpush1.msra.mxu0 %v279
      %1411 = vmatprep.subr.mxu0 %v276
      %1412 = vmatpush1.msra.mxu0 %v275
      %1413 = vmatprep.subr.mxu0 %v272
      %1414 = vmatpush1.msra.mxu0 %v271
      %1415 = vmatprep.subr.mxu0 %v268
      %1416 = vmatpush1.msra.mxu0 %v267
      %1417 = vmatprep.subr.mxu0 %v264
      %1418 = vmatpush1.msra.mxu0 %v263
      %1419 = vmatprep.subr.mxu0 %v260
      %1420 = vmatpush1.msra.mxu0 %v259
      %1421 = vmatprep.subr.mxu0 0.0
      %1422 = vmatpush2.msra.mxu0 0.0
      %1423 = vmatprep.subr.mxu0 0.0
      %1424 = vmatpush2.msra.mxu0 0.0
      %1425 = vmatprep.subr.mxu0 0.0
      %1426 = vmatpush2.msra.mxu0 0.0
      %1427 = vmatprep.subr.mxu0 0.0
      %1428 = vmatpush2.msra.mxu0 0.0
      %1429 = vmatprep.subr.mxu0 0.0
      %1430 = vmatpush2.msra.mxu0 0.0
      %1431 = vmatprep.subr.mxu0 0.0
      %1432 = vmatpush2.msra.mxu0 0.0
      %1433 = vmatprep.subr.mxu0 0.0
      %1434 = vmatpush2.msra.mxu0 0.0
      %1435 = vmatprep.subr.mxu0 0.0
      %1436 = vmatpush2.msra.mxu0 0.0
      %1437 = vmatprep.subr.mxu0 0.0
      %1438 = vmatpush2.msra.mxu0 0.0
      %1439 = vmatprep.subr.mxu0 0.0
      %1440 = vmatpush2.msra.mxu0 0.0
      %1441 = vmatprep.subr.mxu0 0.0
      %1442 = vmatpush2.msra.mxu0 0.0
      %1443 = vmatprep.subr.mxu0 0.0
      %1444 = vmatpush2.msra.mxu0 0.0
      %1445 = vmatprep.subr.mxu0 0.0
      %1446 = vmatpush2.msra.mxu0 0.0
      %1447 = vmatprep.subr.mxu0 0.0
      %1448 = vmatpush2.msra.mxu0 0.0
      %1449 = vmatprep.subr.mxu0 0.0
      %1450 = vmatpush2.msra.mxu0 0.0
      %1451 = vmatprep.subr.mxu0 0.0
      %1452 = vmatpush2.msra.mxu0 0.0
      %1453 = vmatprep.mubr.f32.mxu0 0.0
      %1454 = vmatmul.mubr.f32.gmra.mxu0 %v1380
      %v1455 = vpop.f32.mrf.mxu0
      %v1456 = vadd.f32 %v1381, %v1455
      %v1457 = vpop.f32.mrf.mxu0
      %v1458 = vadd.f32 %v1382, %v1457
      %1459 = vdwg.mxu0
      %1460 = vmatprep.subr.mxu0 %v322
      %1461 = vmatpush1.msra.mxu0 %v321
      %1462 = vmatprep.subr.mxu0 %v318
      %1463 = vmatpush1.msra.mxu0 %v317
      %1464 = vmatprep.subr.mxu0 %v314
      %1465 = vmatpush1.msra.mxu0 %v313
      %1466 = vmatprep.subr.mxu0 %v310
      %1467 = vmatpush1.msra.mxu0 %v309
      %1468 = vmatprep.subr.mxu0 %v306
      %1469 = vmatpush1.msra.mxu0 %v305
      %1470 = vmatprep.subr.mxu0 %v302
      %1471 = vmatpush1.msra.mxu0 %v301
      %1472 = vmatprep.subr.mxu0 %v298
      %1473 = vmatpush1.msra.mxu0 %v297
      %1474 = vmatprep.subr.mxu0 %v294
      %1475 = vmatpush1.msra.mxu0 %v293
      %1476 = vmatprep.subr.mxu0 %v290
      %1477 = vmatpush1.msra.mxu0 %v289
      %1478 = vmatprep.subr.mxu0 %v286
      %1479 = vmatpush1.msra.mxu0 %v285
      %1480 = vmatprep.subr.mxu0 %v282
      %1481 = vmatpush1.msra.mxu0 %v281
      %1482 = vmatprep.subr.mxu0 %v278
      %1483 = vmatpush1.msra.mxu0 %v277
      %1484 = vmatprep.subr.mxu0 %v274
      %1485 = vmatpush1.msra.mxu0 %v273
      %1486 = vmatprep.subr.mxu0 %v270
      %1487 = vmatpush1.msra.mxu0 %v269
      %1488 = vmatprep.subr.mxu0 %v266
      %1489 = vmatpush1.msra.mxu0 %v265
      %1490 = vmatprep.subr.mxu0 %v262
      %1491 = vmatpush1.msra.mxu0 %v261
      %1492 = vmatprep.subr.mxu0 0.0
      %1493 = vmatpush2.msra.mxu0 0.0
      %1494 = vmatprep.subr.mxu0 0.0
      %1495 = vmatpush2.msra.mxu0 0.0
      %1496 = vmatprep.subr.mxu0 0.0
      %1497 = vmatpush2.msra.mxu0 0.0
      %1498 = vmatprep.subr.mxu0 0.0
      %1499 = vmatpush2.msra.mxu0 0.0
      %1500 = vmatprep.subr.mxu0 0.0
      %1501 = vmatpush2.msra.mxu0 0.0
      %1502 = vmatprep.subr.mxu0 0.0
      %1503 = vmatpush2.msra.mxu0 0.0
      %1504 = vmatprep.subr.mxu0 0.0
      %1505 = vmatpush2.msra.mxu0 0.0
      %1506 = vmatprep.subr.mxu0 0.0
      %1507 = vmatpush2.msra.mxu0 0.0
      %1508 = vmatprep.subr.mxu0 0.0
      %1509 = vmatpush2.msra.mxu0 0.0
      %1510 = vmatprep.subr.mxu0 0.0
      %1511 = vmatpush2.msra.mxu0 0.0
      %1512 = vmatprep.subr.mxu0 0.0
      %1513 = vmatpush2.msra.mxu0 0.0
      %1514 = vmatprep.subr.mxu0 0.0
      %1515 = vmatpush2.msra.mxu0 0.0
      %1516 = vmatprep.subr.mxu0 0.0
      %1517 = vmatpush2.msra.mxu0 0.0
      %1518 = vmatprep.subr.mxu0 0.0
      %1519 = vmatpush2.msra.mxu0 0.0
      %1520 = vmatprep.subr.mxu0 0.0
      %1521 = vmatpush2.msra.mxu0 0.0
      %1522 = vmatprep.subr.mxu0 0.0
      %1523 = vmatpush2.msra.mxu0 0.0
      %1524 = vmatprep.mubr.f32.mxu0 0.0
      %1525 = vmatmul.mubr.f32.gmra.mxu0 %v1380
      %v1526 = vpop.f32.mrf.mxu0
      %v1527 = vadd.f32 %v1383, %v1526
      %v1528 = vpop.f32.mrf.mxu0
      %v1529 = vadd.f32 %v1384, %v1528
      %1530 = vdwg.mxu0
      %v1531 = vxor.u32 %v1456, 2147483648
      %v1532 = vxor.u32 %v1458, 2147483648
      %v1533 = vxor.u32 %v1529, 2147483648
      %v1534 = vmul.f32 %v1531, 1.442695
      %v1535 = vpow.pop %v1534
      %v1536 = vmul.f32 %v1532, 1.442695
      %v1537 = vpow.pop %v1536
      %v1538 = vmul.f32 %v1533, 1.442695
      %v1539 = vpow.pop %v1538
      %v1540 = vadd.f32 %v1535, 1.0
      %v1541 = vadd.f32 %v1537, 1.0
      %v1542 = vadd.f32 %v1539, 1.0
      %v1543 = vrcp.pop %v1540
      %v1544 = vmul.f32 1.0, %v1543
      %v1545 = vrcp.pop %v1541
      %v1546 = vmul.f32 1.0, %v1545
      %v1547 = vrcp.pop %v1542
      %v1548 = vmul.f32 1.0, %v1547
      %v1549 = vtanh.pop %v1527
      %v1550 = vmul.f32 %v1546, %v1378
      %v1551 = vmul.f32 %v1544, %v1549
      %v1552 = vadd.f32 %v1550, %v1551
      %v1553 = vtanh.pop %v1552
      %v1554 = vmul.f32 %v1548, %v1553
      %v1555 = vrot.slane %v337, 7
      %v1556 = vrot.slane %v338, 7
      %v1557 = vrot.slane %v339, 7
      %v1558 = vrot.slane %v340, 7
      %1563 = vmatprep.subr.mxu0 %v320
      %1564 = vmatpush1.msra.mxu0 %v319
      %1565 = vmatprep.subr.mxu0 %v316
      %1566 = vmatpush1.msra.mxu0 %v315
      %1567 = vmatprep.subr.mxu0 %v312
      %1568 = vmatpush1.msra.mxu0 %v311
      %1569 = vmatprep.subr.mxu0 %v308
      %1570 = vmatpush1.msra.mxu0 %v307
      %1571 = vmatprep.subr.mxu0 %v304
      %1572 = vmatpush1.msra.mxu0 %v303
      %1573 = vmatprep.subr.mxu0 %v300
      %1574 = vmatpush1.msra.mxu0 %v299
      %1575 = vmatprep.subr.mxu0 %v296
      %1576 = vmatpush1.msra.mxu0 %v295
      %1577 = vmatprep.subr.mxu0 %v292
      %1578 = vmatpush1.msra.mxu0 %v291
      %1579 = vmatprep.subr.mxu0 %v288
      %1580 = vmatpush1.msra.mxu0 %v287
      %1581 = vmatprep.subr.mxu0 %v284
      %1582 = vmatpush1.msra.mxu0 %v283
      %1583 = vmatprep.subr.mxu0 %v280
      %1584 = vmatpush1.msra.mxu0 %v279
      %1585 = vmatprep.subr.mxu0 %v276
      %1586 = vmatpush1.msra.mxu0 %v275
      %1587 = vmatprep.subr.mxu0 %v272
      %1588 = vmatpush1.msra.mxu0 %v271
      %1589 = vmatprep.subr.mxu0 %v268
      %1590 = vmatpush1.msra.mxu0 %v267
      %1591 = vmatprep.subr.mxu0 %v264
      %1592 = vmatpush1.msra.mxu0 %v263
      %1593 = vmatprep.subr.mxu0 %v260
      %1594 = vmatpush1.msra.mxu0 %v259
      %1595 = vmatprep.subr.mxu0 0.0
      %1596 = vmatpush2.msra.mxu0 0.0
      %1597 = vmatprep.subr.mxu0 0.0
      %1598 = vmatpush2.msra.mxu0 0.0
      %1599 = vmatprep.subr.mxu0 0.0
      %1600 = vmatpush2.msra.mxu0 0.0
      %1601 = vmatprep.subr.mxu0 0.0
      %1602 = vmatpush2.msra.mxu0 0.0
      %1603 = vmatprep.subr.mxu0 0.0
      %1604 = vmatpush2.msra.mxu0 0.0
      %1605 = vmatprep.subr.mxu0 0.0
      %1606 = vmatpush2.msra.mxu0 0.0
      %1607 = vmatprep.subr.mxu0 0.0
      %1608 = vmatpush2.msra.mxu0 0.0
      %1609 = vmatprep.subr.mxu0 0.0
      %1610 = vmatpush2.msra.mxu0 0.0
      %1611 = vmatprep.subr.mxu0 0.0
      %1612 = vmatpush2.msra.mxu0 0.0
      %1613 = vmatprep.subr.mxu0 0.0
      %1614 = vmatpush2.msra.mxu0 0.0
      %1615 = vmatprep.subr.mxu0 0.0
      %1616 = vmatpush2.msra.mxu0 0.0
      %1617 = vmatprep.subr.mxu0 0.0
      %1618 = vmatpush2.msra.mxu0 0.0
      %1619 = vmatprep.subr.mxu0 0.0
      %1620 = vmatpush2.msra.mxu0 0.0
      %1621 = vmatprep.subr.mxu0 0.0
      %1622 = vmatpush2.msra.mxu0 0.0
      %1623 = vmatprep.subr.mxu0 0.0
      %1624 = vmatpush2.msra.mxu0 0.0
      %1625 = vmatprep.subr.mxu0 0.0
      %1626 = vmatpush2.msra.mxu0 0.0
      %1627 = vmatprep.mubr.f32.mxu0 0.0
      %1628 = vmatmul.mubr.f32.gmra.mxu0 %v1554
      %v1629 = vpop.f32.mrf.mxu0
      %v1630 = vadd.f32 %v1555, %v1629
      %v1631 = vpop.f32.mrf.mxu0
      %v1632 = vadd.f32 %v1556, %v1631
      %1633 = vdwg.mxu0
      %1634 = vmatprep.subr.mxu0 %v322
      %1635 = vmatpush1.msra.mxu0 %v321
      %1636 = vmatprep.subr.mxu0 %v318
      %1637 = vmatpush1.msra.mxu0 %v317
      %1638 = vmatprep.subr.mxu0 %v314
      %1639 = vmatpush1.msra.mxu0 %v313
      %1640 = vmatprep.subr.mxu0 %v310
      %1641 = vmatpush1.msra.mxu0 %v309
      %1642 = vmatprep.subr.mxu0 %v306
      %1643 = vmatpush1.msra.mxu0 %v305
      %1644 = vmatprep.subr.mxu0 %v302
      %1645 = vmatpush1.msra.mxu0 %v301
      %1646 = vmatprep.subr.mxu0 %v298
      %1647 = vmatpush1.msra.mxu0 %v297
      %1648 = vmatprep.subr.mxu0 %v294
      %1649 = vmatpush1.msra.mxu0 %v293
      %1650 = vmatprep.subr.mxu0 %v290
      %1651 = vmatpush1.msra.mxu0 %v289
      %1652 = vmatprep.subr.mxu0 %v286
      %1653 = vmatpush1.msra.mxu0 %v285
      %1654 = vmatprep.subr.mxu0 %v282
      %1655 = vmatpush1.msra.mxu0 %v281
      %1656 = vmatprep.subr.mxu0 %v278
      %1657 = vmatpush1.msra.mxu0 %v277
      %1658 = vmatprep.subr.mxu0 %v274
      %1659 = vmatpush1.msra.mxu0 %v273
      %1660 = vmatprep.subr.mxu0 %v270
      %1661 = vmatpush1.msra.mxu0 %v269
      %1662 = vmatprep.subr.mxu0 %v266
      %1663 = vmatpush1.msra.mxu0 %v265
      %1664 = vmatprep.subr.mxu0 %v262
      %1665 = vmatpush1.msra.mxu0 %v261
      %1666 = vmatprep.subr.mxu0 0.0
      %1667 = vmatpush2.msra.mxu0 0.0
      %1668 = vmatprep.subr.mxu0 0.0
      %1669 = vmatpush2.msra.mxu0 0.0
      %1670 = vmatprep.subr.mxu0 0.0
      %1671 = vmatpush2.msra.mxu0 0.0
      %1672 = vmatprep.subr.mxu0 0.0
      %1673 = vmatpush2.msra.mxu0 0.0
      %1674 = vmatprep.subr.mxu0 0.0
      %1675 = vmatpush2.msra.mxu0 0.0
      %1676 = vmatprep.subr.mxu0 0.0
      %1677 = vmatpush2.msra.mxu0 0.0
      %1678 = vmatprep.subr.mxu0 0.0
      %1679 = vmatpush2.msra.mxu0 0.0
      %1680 = vmatprep.subr.mxu0 0.0
      %1681 = vmatpush2.msra.mxu0 0.0
      %1682 = vmatprep.subr.mxu0 0.0
      %1683 = vmatpush2.msra.mxu0 0.0
      %1684 = vmatprep.subr.mxu0 0.0
      %1685 = vmatpush2.msra.mxu0 0.0
      %1686 = vmatprep.subr.mxu0 0.0
      %1687 = vmatpush2.msra.mxu0 0.0
      %1688 = vmatprep.subr.mxu0 0.0
      %1689 = vmatpush2.msra.mxu0 0.0
      %1690 = vmatprep.subr.mxu0 0.0
      %1691 = vmatpush2.msra.mxu0 0.0
      %1692 = vmatprep.subr.mxu0 0.0
      %1693 = vmatpush2.msra.mxu0 0.0
      %1694 = vmatprep.subr.mxu0 0.0
      %1695 = vmatpush2.msra.mxu0 0.0
      %1696 = vmatprep.subr.mxu0 0.0
      %1697 = vmatpush2.msra.mxu0 0.0
      %1698 = vmatprep.mubr.f32.mxu0 0.0
      %1699 = vmatmul.mubr.f32.gmra.mxu0 %v1554
      %v1700 = vpop.f32.mrf.mxu0
      %v1701 = vadd.f32 %v1557, %v1700
      %v1702 = vpop.f32.mrf.mxu0
      %v1703 = vadd.f32 %v1558, %v1702
      %1704 = vdwg.mxu0
      %v1705 = vxor.u32 %v1630, 2147483648
      %v1706 = vxor.u32 %v1632, 2147483648
      %v1707 = vxor.u32 %v1703, 2147483648
      %v1708 = vmul.f32 %v1705, 1.442695
      %v1709 = vpow.pop %v1708
      %v1710 = vmul.f32 %v1706, 1.442695
      %v1711 = vpow.pop %v1710
      %v1712 = vmul.f32 %v1707, 1.442695
      %v1713 = vpow.pop %v1712
      %v1714 = vadd.f32 %v1709, 1.0
      %v1715 = vadd.f32 %v1711, 1.0
      %v1716 = vadd.f32 %v1713, 1.0
      %v1717 = vrcp.pop %v1714
      %v1718 = vmul.f32 1.0, %v1717
      %v1719 = vrcp.pop %v1715
      %v1720 = vmul.f32 1.0, %v1719
      %v1721 = vrcp.pop %v1716
      %v1722 = vmul.f32 1.0, %v1721
      %v1723 = vtanh.pop %v1701
      %v1724 = vmul.f32 %v1720, %v1552
      %v1725 = vmul.f32 %v1718, %v1723
      %v1726 = vadd.f32 %v1724, %v1725
      %v1727 = vtanh.pop %v1726
      %v1728 = vmul.f32 %v1722, %v1727
      %v1730 = vrot.slane %v684, 7
      %v1733 = vrot.slane %v858, 6
      %v1736 = vrot.slane %v1032, 5
      %v1739 = vrot.slane %v1206, 4
      %v1742 = vrot.slane %v1380, 3
      %v1745 = vrot.slane %v1554, 2
      %v1748 = vrot.slane %v1728, 1
      %v1750 = vsel %vm88, %v506, %v1730
      %vm1751 = vcmask 1041408
      %v1752 = vsel %vm1751, %v1750, %v1733
      %vm1753 = vcmask 1042432
      %v1754 = vsel %vm1753, %v1752, %v1736
      %vm1755 = vcmask 1043456
      %v1756 = vsel %vm1755, %v1754, %v1739
      %vm1757 = vcmask 1044480
      %v1758 = vsel %vm1757, %v1756, %v1742
      %vm1759 = vcmask 1045504
      %v1760 = vsel %vm1759, %v1758, %v1745
      %vm1761 = vcmask 1046528
      %v1762 = vsel %vm1761, %v1760, %v1748
      %s1763 = scalar_lea.vmem [#allocation3], %s331
      %1764 = vst [vmem:[%s1763] sm:$0xff] %v1762
    $region34: #{tpu_custom_call.1} parent=1 // loop_footer
      %s328 = sadd.s32 1, %s324
    $region35: #{tpu_custom_call.1} parent=1 // loop_footer_branch
      %323 = sbr.rel target = $region31
    $region36: #{tpu_custom_call.1} parent=1 // loop_exit
      _
    %v1765 = vld [vmem:[#allocation3] sm:$0xff]
    %v1766 = vld [vmem:[#allocation3 + $0x8] sm:$0xff]
    %v1767 = vld [vmem:[%s4] sm:$0xff]
    %v1768 = vld [vmem:[%s4 + $0x8] sm:$0xff]
    %v1769 = vld [vmem:[%s4 + $0x10] sm:$0xff]
    %v1770 = vld [vmem:[%s4 + $0x18] sm:$0xff]
    %v1771 = vld [vmem:[%s4 + $0x20] sm:$0xff]
    %v1772 = vld [vmem:[%s4 + $0x28] sm:$0xff]
    %v1773 = vld [vmem:[%s4 + $0x30] sm:$0xff]
    %v1774 = vld [vmem:[%s4 + $0x38] sm:$0xff]
    %v1775 = vld [vmem:[%s4 + $0x40] sm:$0xff]
    %v1776 = vld [vmem:[%s4 + $0x48] sm:$0xff]
    %v1777 = vld [vmem:[%s4 + $0x50] sm:$0xff]
    %v1778 = vld [vmem:[%s4 + $0x58] sm:$0xff]
    %v1779 = vld [vmem:[%s4 + $0x60] sm:$0xff]
    %v1780 = vld [vmem:[%s4 + $0x68] sm:$0xff]
    %v1781 = vld [vmem:[%s4 + $0x70] sm:$0xff]
    %v1782 = vld [vmem:[%s4 + $0x78] sm:$0xff]
    %v1783 = vld [vmem:[#allocation4] sm:$0x1]
    %v1785 = vlaneseq
    %v1786 = vshrl.u32 %v1785, 7
    %v1787 = vsub.s32 0, %v1786
    %v1788 = vrot.slane %v1783, %v1787
    %1790 = vmatprep.subr.mxu0 0.0
    %1791 = vmatpush1.msra.mxu0 %v1782
    %1792 = vmatprep.subr.mxu0 0.0
    %1793 = vmatpush1.msra.mxu0 %v1781
    %1794 = vmatprep.subr.mxu0 0.0
    %1795 = vmatpush1.msra.mxu0 %v1780
    %1796 = vmatprep.subr.mxu0 0.0
    %1797 = vmatpush1.msra.mxu0 %v1779
    %1798 = vmatprep.subr.mxu0 0.0
    %1799 = vmatpush1.msra.mxu0 %v1778
    %1800 = vmatprep.subr.mxu0 0.0
    %1801 = vmatpush1.msra.mxu0 %v1777
    %1802 = vmatprep.subr.mxu0 0.0
    %1803 = vmatpush1.msra.mxu0 %v1776
    %1804 = vmatprep.subr.mxu0 0.0
    %1805 = vmatpush1.msra.mxu0 %v1775
    %1806 = vmatprep.subr.mxu0 0.0
    %1807 = vmatpush1.msra.mxu0 %v1774
    %1808 = vmatprep.subr.mxu0 0.0
    %1809 = vmatpush1.msra.mxu0 %v1773
    %1810 = vmatprep.subr.mxu0 0.0
    %1811 = vmatpush1.msra.mxu0 %v1772
    %1812 = vmatprep.subr.mxu0 0.0
    %1813 = vmatpush1.msra.mxu0 %v1771
    %1814 = vmatprep.subr.mxu0 0.0
    %1815 = vmatpush1.msra.mxu0 %v1770
    %1816 = vmatprep.subr.mxu0 0.0
    %1817 = vmatpush1.msra.mxu0 %v1769
    %1818 = vmatprep.subr.mxu0 0.0
    %1819 = vmatpush1.msra.mxu0 %v1768
    %1820 = vmatprep.subr.mxu0 0.0
    %1821 = vmatpush1.msra.mxu0 %v1767
    %1822 = vmatprep.subr.mxu0 0.0
    %1823 = vmatpush2.msra.mxu0 0.0
    %1824 = vmatprep.subr.mxu0 0.0
    %1825 = vmatpush2.msra.mxu0 0.0
    %1826 = vmatprep.subr.mxu0 0.0
    %1827 = vmatpush2.msra.mxu0 0.0
    %1828 = vmatprep.subr.mxu0 0.0
    %1829 = vmatpush2.msra.mxu0 0.0
    %1830 = vmatprep.subr.mxu0 0.0
    %1831 = vmatpush2.msra.mxu0 0.0
    %1832 = vmatprep.subr.mxu0 0.0
    %1833 = vmatpush2.msra.mxu0 0.0
    %1834 = vmatprep.subr.mxu0 0.0
    %1835 = vmatpush2.msra.mxu0 0.0
    %1836 = vmatprep.subr.mxu0 0.0
    %1837 = vmatpush2.msra.mxu0 0.0
    %1838 = vmatprep.subr.mxu0 0.0
    %1839 = vmatpush2.msra.mxu0 0.0
    %1840 = vmatprep.subr.mxu0 0.0
    %1841 = vmatpush2.msra.mxu0 0.0
    %1842 = vmatprep.subr.mxu0 0.0
    %1843 = vmatpush2.msra.mxu0 0.0
    %1844 = vmatprep.subr.mxu0 0.0
    %1845 = vmatpush2.msra.mxu0 0.0
    %1846 = vmatprep.subr.mxu0 0.0
    %1847 = vmatpush2.msra.mxu0 0.0
    %1848 = vmatprep.subr.mxu0 0.0
    %1849 = vmatpush2.msra.mxu0 0.0
    %1850 = vmatprep.subr.mxu0 0.0
    %1851 = vmatpush2.msra.mxu0 0.0
    %1852 = vmatprep.subr.mxu0 0.0
    %1853 = vmatpush2.msra.mxu0 0.0
    %1854 = vmatprep.mubr.f32.mxu0 0.0
    %1855 = vmatmul.mubr.f32.gmra.mxu0 %v1765
    %v1856 = vpop.f32.mrf.mxu0
    %v1857 = vadd.f32 %v1788, %v1856
    %v1858 = vpop.f32.mrf.mxu0
    %1859 = vmatprep.mubr.f32.mxu0 0.0
    %1860 = vmatmul.mubr.f32.gmra.mxu0 %v1766
    %v1861 = vpop.f32.mrf.mxu0
    %v1862 = vadd.f32 %v1788, %v1861
    %v1863 = vpop.f32.mrf.mxu0
    %1864 = vdwg.mxu0
    %1865 = vst.msk [vmem:[%s6] sm:$0xff] %vm81, %v1857
    %1866 = vst.msk [vmem:[%s6 + $0x8] sm:$0xff] %vm81, %v1862
    // Predicated region
    $region37: #{tpu_custom_call.1} parent=1 // pred_check
      _
    $region38: #{tpu_custom_call.1} parent=1 // pred_check_branch
      %1868 = sbr.rel (0) target = $region40
    $region39: #{tpu_custom_call.1} parent=1 // pred_region
      _
    $region40: #{tpu_custom_call.1} parent=1 // pred_fallthru
      _
    // Predicated region
    $region41: #{tpu_custom_call.1} parent=1 // pred_check
      _
    $region42: #{tpu_custom_call.1} parent=1 // pred_check_branch
      %1870 = sbr.rel (0) target = $region44
    $region43: #{tpu_custom_call.1} parent=1 // pred_region
      _
    $region44: #{tpu_custom_call.1} parent=1 // pred_fallthru
      _
    %1871 = vsyncpa [#allocation6], 1

</llo_original>
